<compile_context>
chip_gen: v7x
topology: tpu7x:2x2x1
jax: 0.10.0
libtpu: 0.0.40
codegen_flags: <defaults>
</compile_context>

<pallas_src>
import functools
import math

import jax
import jax.numpy as jnp
from jax import lax
from jax.experimental import pallas as pl
from jax.experimental.pallas import tpu as pltpu

F32 = jnp.float32
LN_EPS = 1e-5  # torch.nn.LayerNorm default

# ----------------------------- test configuration -------------------------- #
BATCH = 2
N_EXTRA_SEQ = 8        # S  (extra MSA sequences)
N_RES = 16             # N  (residues)
C_MSA = 32             # global_config['extra_msa_channel']
C_PAIR = 32            # global_config['pair_channel']
ROW_ATTN_C, ROW_HEADS = 8, 4
COL_ATTN_C, COL_HEADS = 8, 4
OPM_MID = 8
TRI_MID = 16
TRI_ATTN_C, TRI_HEADS = 8, 4
TRANSITION_FACTOR = 4

# ----------------------------- small helpers ------------------------------- #

def _pick_row_tile(m, row_bytes, max_bytes=4 << 20, target=1024):
    """Row tile that divides m, is a multiple of 8, caps VMEM block bytes and keeps
    >= 2 grid steps (megacore).  Falls back to the full extent (always legal)."""
    cap = min(target, max(8, max_bytes // max(row_bytes, 1)))
    if m >= 16:
        cap = min(cap, m // 2)
    if m <= cap:
        return m
    for t in range(min(cap, m), 7, -1):
        if m % t == 0 and t % 8 == 0:
            return t
    # TODO(synk): pad & mask a partial last tile for awkward M instead of the full extent.
    return m


def _pick_mm_tile(d, target=512):
    if d <= target:
        return d
    for t in range(target, 127, -128):
        if d % t == 0:
            return t
    return d  # TODO(synk): pad for awkward extents


def _flat2d(x):
    return x.reshape(-1, x.shape[-1])


def _parallel(n):
    return pltpu.CompilerParams(dimension_semantics=("parallel",) * n)


def _ln_rows(x, g, b):
    mu = jnp.mean(x, axis=-1, keepdims=True)
    xc = x - mu
    var = jnp.mean(xc * xc, axis=-1, keepdims=True)
    return xc * lax.rsqrt(var + LN_EPS) * g + b


def _softmax_rows(logits):
    logits = logits - jnp.max(logits, axis=-1, keepdims=True)
    p = jnp.exp(logits)
    return p * pl.reciprocal(jnp.sum(p, axis=-1, keepdims=True), approx=True)


# ------------------------------ Pallas kernels ------------------------------ #

def _ln_linear_kernel(x_ref, g_ref, b_ref, w_ref, wb_ref, o_ref, *, mxu):
    x = x_ref[...].astype(F32)
    xn = _ln_rows(x, g_ref[...], b_ref[...])
    y = jnp.dot(xn.astype(mxu), w_ref[...].astype(mxu), preferred_element_type=F32) + wb_ref[...]
    o_ref[...] = y.astype(o_ref.dtype)


def _transition_kernel(x_ref, g_ref, b_ref, w1_ref, b1_ref, w2_ref, b2_ref, o_ref, *, mxu):
    x = x_ref[...].astype(F32)
    xn = _ln_rows(x, g_ref[...], b_ref[...])
    h = jnp.dot(xn.astype(mxu), w1_ref[...].astype(mxu), preferred_element_type=F32) + b1_ref[...]
    h = jnp.maximum(h, 0.0)
    y = jnp.dot(h.astype(mxu), w2_ref[...].astype(mxu), preferred_element_type=F32) + b2_ref[...]
    o_ref[...] = y.astype(o_ref.dtype)


def _pair_bias_kernel(x_ref, g_ref, b_ref, wf_ref, o_ref, *, mxu):
    # LayerNorm(pair rows) @ Wf^T, emitted head-major (H, rows) -> lane-dense store.
    ti, nk, c = x_ref.shape
    x = x_ref[...].reshape(ti * nk, c).astype(F32)
    xn = _ln_rows(x, g_ref[...], b_ref[...])
    zt = lax.dot_general(wf_ref[...].astype(mxu), xn.astype(mxu),
                         (((1,), (1,)), ((), ())), preferred_element_type=F32)
    o_ref[...] = zt.astype(o_ref.dtype)


def _mha_kernel(qkvg_ref, mask_ref, pbias_ref, wo_ref, bo_ref, o_ref,
                *, num_heads, head_c, scale, mxu):
    # Gated multi-head attention, all heads folded in; output projection fused.
    hc = num_heads * head_c
    qkvg = qkvg_ref[...].astype(F32)                                 # (Nq, 4*Hc)
    mask_bias = 1e9 * (mask_ref[...].astype(F32) - 1.0)              # (1, Nk)
    ctxs = []
    for h in range(num_heads):
        q = qkvg[:, h * head_c:(h + 1) * head_c] * scale
        k = qkvg[:, hc + h * head_c: hc + (h + 1) * head_c]
        v = qkvg[:, 2 * hc + h * head_c: 2 * hc + (h + 1) * head_c]
        g = qkvg[:, 3 * hc + h * head_c: 3 * hc + (h + 1) * head_c]
        logits = lax.dot_general(q.astype(mxu), k.astype(mxu),
                                 (((1,), (1,)), ((), ())), preferred_element_type=F32)
        logits = logits + mask_bias + pbias_ref[h]
        a = _softmax_rows(logits)
        ctx = jnp.dot(a.astype(mxu), v.astype(mxu), preferred_element_type=F32)
        ctxs.append(ctx * jax.nn.sigmoid(g))
    o = jnp.concatenate(ctxs, axis=-1)                               # (Nq, Hc)
    o = jnp.dot(o.astype(mxu), wo_ref[...].astype(mxu), preferred_element_type=F32) + bo_ref[...]
    o_ref[...] = o.astype(o_ref.dtype)


def _global_attn_kernel(x_ref, g_ref, b_ref, wq_ref, wkvg_ref, bkvg_ref, wo_ref, bo_ref, o_ref,
                        *, num_heads, head_c, scale, mxu):
    # ExtraColumnGlobalAttention, fully fused per (batch, residue): LN + kvg proj + averaged
    # query + softmax + gate + output projection.
    x = x_ref[...].astype(F32)                                       # (S, C)
    xn = _ln_rows(x, g_ref[...], b_ref[...])
    q_avg = jnp.mean(xn, axis=0, keepdims=True)                      # (1, C)
    qrow = jnp.dot(q_avg.astype(mxu), wq_ref[...].astype(mxu),
                   preferred_element_type=F32)                       # (1, Hc)
    kvg = jnp.dot(xn.astype(mxu), wkvg_ref[...].astype(mxu),
                  preferred_element_type=F32) + bkvg_ref[...]        # (S, 2c + Hc)
    k = kvg[:, :head_c]
    v = kvg[:, head_c:2 * head_c]
    gate = jax.nn.sigmoid(kvg[:, 2 * head_c:])                       # (S, Hc)
    outs = []
    for h in range(num_heads):
        qh = qrow[:, h * head_c:(h + 1) * head_c] * scale            # (1, c)
        logits = lax.dot_general(qh.astype(mxu), k.astype(mxu),
                                 (((1,), (1,)), ((), ())), preferred_element_type=F32)
        a = _softmax_rows(logits)                                    # (1, S)
        ctx = jnp.dot(a.astype(mxu), v.astype(mxu), preferred_element_type=F32)  # (1, c)
        outs.append(gate[:, h * head_c:(h + 1) * head_c] * ctx)      # (S, c)
    o1 = jnp.concatenate(outs, axis=-1)                              # (S, Hc)
    o = jnp.dot(o1.astype(mxu), wo_ref[...].astype(mxu), preferred_element_type=F32) + bo_ref[...]
    o_ref[...] = o.astype(o_ref.dtype)


def _opm_proj_kernel(x_ref, m_ref, g_ref, b_ref, w_ref, wb_ref, l_ref, r_ref, *, mid, mxu):
    # Fused LN + concatenated left/right projection + mask multiply.
    x = x_ref[...].astype(F32)
    xn = _ln_rows(x, g_ref[...], b_ref[...])
    y = jnp.dot(xn.astype(mxu), w_ref[...].astype(mxu), preferred_element_type=F32) + wb_ref[...]
    y = m_ref[...] * y
    l_ref[...] = y[:, :mid].astype(l_ref.dtype)
    r_ref[...] = y[:, mid:].astype(r_ref.dtype)


def _opm_bmm_kernel(l_ref, r_ref, o_ref, acc_ref, *, mxu):
    # acc[p, q] += sum_s l[s, p] * r[s, q]   (S reduction axis, P3 accumulator pattern)
    @pl.when(pl.program_id(3) == 0)
    def _():
        acc_ref[...] = jnp.zeros_like(acc_ref)

    acc_ref[...] += lax.dot_general(l_ref[...].astype(mxu), r_ref[...].astype(mxu),
                                    (((0,), (0,)), ((), ())), preferred_element_type=F32)

    @pl.when(pl.program_id(3) == pl.num_programs(3) - 1)
    def _():
        o_ref[...] = acc_ref[...].astype(o_ref.dtype)


def _mask_norm_kernel(m_ref, o_ref):
    m = m_ref[...].astype(F32)
    o_ref[...] = lax.dot_general(m, m, (((0,), (0,)), ((), ())),
                                 preferred_element_type=F32).astype(o_ref.dtype)


def _opm_out_kernel(x_ref, n_ref, w_ref, wb_ref, o_ref, *, mxu):
    y = jnp.dot(x_ref[...].astype(mxu), w_ref[...].astype(mxu),
                preferred_element_type=F32) + wb_ref[...]
    o_ref[...] = (y / (n_ref[...] + 1e-3)).astype(o_ref.dtype)


def _trimul_proj_kernel(x_ref, m_ref, g_ref, b_ref, w_ref, wb_ref, lr_ref, gv_ref, *, mid, mxu):
    # Fused LN + concatenated (left|right|left_gate|right_gate|gating) projection.
    x = x_ref[...].astype(F32)
    xn = _ln_rows(x, g_ref[...], b_ref[...])
    y = jnp.dot(xn.astype(mxu), w_ref[...].astype(mxu), preferred_element_type=F32) + wb_ref[...]
    msk = m_ref[...]
    left = msk * y[:, :mid] * jax.nn.sigmoid(y[:, 2 * mid:3 * mid])
    right = msk * y[:, mid:2 * mid] * jax.nn.sigmoid(y[:, 3 * mid:4 * mid])
    lr_ref[...] = jnp.concatenate([left, right], axis=-1).astype(lr_ref.dtype)
    gv_ref[...] = y[:, 4 * mid:].astype(gv_ref.dtype)


def _trimul_core_kernel(lr_ref, gv_ref, g_ref, b_ref, w_ref, wb_ref, o_ref,
                        *, mid, outgoing, mxu):
    # Channel-batched triangle einsum + center LN + output projection + sigmoid gate,
    # all in one per-batch kernel (channel-first transposes stay in VMEM / XLU).
    n = lr_ref.shape[0]
    lr = lr_ref[...].astype(F32)                                     # (N, N, 2*mid)
    left = lr[:, :, :mid]
    right = lr[:, :, mid:]
    lc = jnp.swapaxes(jnp.swapaxes(left, 1, 2), 0, 1)                # (mid, N, N)
    rc = jnp.swapaxes(jnp.swapaxes(right, 1, 2), 0, 1)
    if outgoing:    # out[i,j,c] = sum_k left[i,k,c] * right[j,k,c]
        t = lax.dot_general(lc.astype(mxu), rc.astype(mxu),
                            (((2,), (2,)), ((0,), (0,))), preferred_element_type=F32)
    else:           # out[i,j,c] = sum_k left[k,j,c] * right[k,i,c]
        t = lax.dot_general(rc.astype(mxu), lc.astype(mxu),
                            (((1,), (1,)), ((0,), (0,))), preferred_element_type=F32)
    tt = jnp.swapaxes(jnp.swapaxes(t, 0, 1), 1, 2)                   # (N, N, mid)
    xz = tt.reshape(n * n, mid)
    xn = _ln_rows(xz, g_ref[...], b_ref[...])
    y = jnp.dot(xn.astype(mxu), w_ref[...].astype(mxu), preferred_element_type=F32) + wb_ref[...]
    gv = gv_ref[...].reshape(n * n, -1).astype(F32)
    o = y * jax.nn.sigmoid(gv)
    o_ref[...] = o.reshape(n, n, -1).astype(o_ref.dtype)


# ------------------------------ kernel wrappers ----------------------------- #

def pallas_ln_linear(x, ln_g, ln_b, w_cat, b_cat, mxu):
    """Fused LayerNorm + Linear.  w_cat: (Cout, Cin) PyTorch layout."""
    orig = x.shape
    cin = orig[-1]
    cout = w_cat.shape[0]
    x2 = _flat2d(x)
    m = x2.shape[0]
    tm = _pick_row_tile(m, (cin + cout) * 4)
    b2 = jnp.zeros((1, cout), F32) if b_cat is None else b_cat.reshape(1, cout)
    out = pl.pallas_call(
        functools.partial(_ln_linear_kernel, mxu=mxu),
        out_shape=jax.ShapeDtypeStruct((m, cout), F32),
        grid=(m // tm,),
        in_specs=[
            pl.BlockSpec((tm, cin), lambda i: (i, 0)),
            pl.BlockSpec((1, cin), lambda i: (0, 0)),
            pl.BlockSpec((1, cin), lambda i: (0, 0)),
            pl.BlockSpec((cin, cout), lambda i: (0, 0)),
            pl.BlockSpec((1, cout), lambda i: (0, 0)),
        ],
        out_specs=pl.BlockSpec((tm, cout), lambda i: (i, 0)),
        compiler_params=_parallel(1),
    )(x2, ln_g.reshape(1, cin), ln_b.reshape(1, cin), w_cat.T, b2)
    return out.reshape(orig[:-1] + (cout,))


def pallas_transition(x, p, mxu):
    orig = x.shape
    c = orig[-1]
    cm = p['w1'].shape[0]
    x2 = _flat2d(x)
    m = x2.shape[0]
    tm = _pick_row_tile(m, (c + cm + c) * 4)
    out = pl.pallas_call(
        functools.partial(_transition_kernel, mxu=mxu),
        out_shape=jax.ShapeDtypeStruct((m, c), F32),
        grid=(m // tm,),
        in_specs=[
            pl.BlockSpec((tm, c), lambda i: (i, 0)),
            pl.BlockSpec((1, c), lambda i: (0, 0)),
            pl.BlockSpec((1, c), lambda i: (0, 0)),
            pl.BlockSpec((c, cm), lambda i: (0, 0)),
            pl.BlockSpec((1, cm), lambda i: (0, 0)),
            pl.BlockSpec((cm, c), lambda i: (0, 0)),
            pl.BlockSpec((1, c), lambda i: (0, 0)),
        ],
        out_specs=pl.BlockSpec((tm, c), lambda i: (i, 0)),
        compiler_params=_parallel(1),
    )(x2, p['ln_g'].reshape(1, c), p['ln_b'].reshape(1, c),
      p['w1'].T, p['b1'].reshape(1, cm), p['w2'].T, p['b2'].reshape(1, c))
    return out.reshape(orig)


def pallas_pair_bias(pair, ln_g, ln_b, wf, mxu):
    """Head-major pair bias: (B, H, N, N) = Wf @ LayerNorm(pair)."""
    b_, n, _, c = pair.shape
    h = wf.shape[0]
    ti = _pick_row_tile(n, n * c * 4, target=max(8, n))
    out = pl.pallas_call(
        functools.partial(_pair_bias_kernel, mxu=mxu),
        out_shape=jax.ShapeDtypeStruct((b_, h, n * n), F32),
        grid=(b_, n // ti),
        in_specs=[
            pl.BlockSpec((None, ti, n, c), lambda b, i: (b, i, 0, 0)),
            pl.BlockSpec((1, c), lambda b, i: (0, 0)),
            pl.BlockSpec((1, c), lambda b, i: (0, 0)),
            pl.BlockSpec((h, c), lambda b, i: (0, 0)),
        ],
        out_specs=pl.BlockSpec((None, h, ti * n), lambda b, i: (b, 0, i)),
        compiler_params=_parallel(2),
    )(pair, ln_g.reshape(1, c), ln_b.reshape(1, c), wf)
    return out.reshape(b_, h, n, n)   # free (row-major) reshape


def pallas_mha(qkvg, mask, pbias, out_w, out_b, num_heads, head_c, mxu):
    """qkvg: (G0, G1, Nq, 4*H*c); mask: (G0, G1, Nk); pbias: (G0, H, Nq, Nk)."""
    g0, g1, nq, _ = qkvg.shape
    nk = pbias.shape[-1]
    hc = num_heads * head_c
    c_out = out_w.shape[0]
    mask4 = mask[:, :, None, :]
    scale = 1.0 / math.sqrt(head_c)
    return pl.pallas_call(
        functools.partial(_mha_kernel, num_heads=num_heads, head_c=head_c,
                          scale=scale, mxu=mxu),
        out_shape=jax.ShapeDtypeStruct((g0, g1, nq, c_out), F32),
        grid=(g0, g1),
        in_specs=[
            pl.BlockSpec((None, None, nq, 4 * hc), lambda b, s: (b, s, 0, 0)),
            pl.BlockSpec((None, None, 1, nk), lambda b, s: (b, s, 0, 0)),
            # constant over the inner grid axis -> fetched once per batch
            pl.BlockSpec((None, num_heads, nq, nk), lambda b, s: (b, 0, 0, 0)),
            pl.BlockSpec((hc, c_out), lambda b, s: (0, 0)),
            pl.BlockSpec((1, c_out), lambda b, s: (0, 0)),
        ],
        out_specs=pl.BlockSpec((None, None, nq, c_out), lambda b, s: (b, s, 0, 0)),
        compiler_params=_parallel(2),
    )(qkvg, mask4, pbias, out_w.T, out_b.reshape(1, c_out))


def pallas_global_attention(msa_t, p, mxu):
    """msa_t: (B, N, S, C) (sequence-transposed msa); returns (B, N, S, C)."""
    b_, n, s, c = msa_t.shape
    h, hcc = p['num_heads'], p['attn_c']
    hc = h * hcc
    wkvg = jnp.concatenate([p['k_w'], p['v_w'], p['gate_w']], axis=0)   # (2c + Hc, C)
    bkvg = jnp.concatenate([jnp.zeros((2 * hcc,), F32), p['gate_b']]).reshape(1, -1)
    scale = 1.0 / math.sqrt(hcc)
    return pl.pallas_call(
        functools.partial(_global_attn_kernel, num_heads=h, head_c=hcc,
                          scale=scale, mxu=mxu),
        out_shape=jax.ShapeDtypeStruct((b_, n, s, c), F32),
        grid=(b_, n),
        in_specs=[
            pl.BlockSpec((None, None, s, c), lambda b, i: (b, i, 0, 0)),
            pl.BlockSpec((1, c), lambda b, i: (0, 0)),
            pl.BlockSpec((1, c), lambda b, i: (0, 0)),
            pl.BlockSpec((c, hc), lambda b, i: (0, 0)),
            pl.BlockSpec((c, 2 * hcc + hc), lambda b, i: (0, 0)),
            pl.BlockSpec((1, 2 * hcc + hc), lambda b, i: (0, 0)),
            pl.BlockSpec((hc, c), lambda b, i: (0, 0)),
            pl.BlockSpec((1, c), lambda b, i: (0, 0)),
        ],
        out_specs=pl.BlockSpec((None, None, s, c), lambda b, i: (b, i, 0, 0)),
        compiler_params=_parallel(2),
    )(msa_t, p['qn_g'].reshape(1, c), p['qn_b'].reshape(1, c),
      p['q_w'].T, wkvg.T, bkvg, p['out_w'].T, p['out_b'].reshape(1, c))


def pallas_opm_proj(act, mask, p, mxu):
    b_, s, n, c = act.shape
    mid = p['left_w'].shape[0]
    x2 = act.reshape(-1, c)
    mcol = mask.reshape(-1, 1)
    m = x2.shape[0]
    tm = _pick_row_tile(m, (c + 2 * mid) * 4)
    wcat = jnp.concatenate([p['left_w'], p['right_w']], axis=0)          # (2*mid, C)
    bcat = jnp.concatenate([p['left_b'], p['right_b']]).reshape(1, -1)
    left, right = pl.pallas_call(
        functools.partial(_opm_proj_kernel, mid=mid, mxu=mxu),
        out_shape=(jax.ShapeDtypeStruct((m, mid), F32),
                   jax.ShapeDtypeStruct((m, mid), F32)),
        grid=(m // tm,),
        in_specs=[
            pl.BlockSpec((tm, c), lambda i: (i, 0)),
            pl.BlockSpec((tm, 1), lambda i: (i, 0)),
            pl.BlockSpec((1, c), lambda i: (0, 0)),
            pl.BlockSpec((1, c), lambda i: (0, 0)),
            pl.BlockSpec((c, 2 * mid), lambda i: (0, 0)),
            pl.BlockSpec((1, 2 * mid), lambda i: (0, 0)),
        ],
        out_specs=(pl.BlockSpec((tm, mid), lambda i: (i, 0)),
                   pl.BlockSpec((tm, mid), lambda i: (i, 0))),
        compiler_params=_parallel(1),
    )(x2, mcol, p['ln_g'].reshape(1, c), p['ln_b'].reshape(1, c), wcat.T, bcat)
    # (B*S*N, mid) -> (B, S, N*mid): contiguity-preserving, free
    return left.reshape(b_, s, n * mid), right.reshape(b_, s, n * mid)


def pallas_opm_bmm(left, right, mxu):
    """Per-batch (S, P)^T @ (S, Q) with S-reduction tiling and lane-dense output tiles."""
    b_, s, p_dim = left.shape
    q_dim = right.shape[-1]
    tp = _pick_mm_tile(p_dim)
    tq = _pick_mm_tile(q_dim)
    ts = _pick_row_tile(s, max(p_dim, q_dim) * 4, target=512)
    return pl.pallas_call(
        functools.partial(_opm_bmm_kernel, mxu=mxu),
        out_shape=jax.ShapeDtypeStruct((b_, p_dim, q_dim), F32),
        grid=(b_, p_dim // tp, q_dim // tq, s // ts),
        in_specs=[
            pl.BlockSpec((None, ts, tp), lambda b, i, j, k: (b, k, i)),
            pl.BlockSpec((None, ts, tq), lambda b, i, j, k: (b, k, j)),
        ],
        out_specs=pl.BlockSpec((None, tp, tq), lambda b, i, j, k: (b, i, j)),
        scratch_shapes=[pltpu.VMEM((tp, tq), F32)],
        compiler_params=pltpu.CompilerParams(
            dimension_semantics=("parallel", "parallel", "parallel", "arbitrary")),
    )(left, right)


def pallas_mask_norm(mask):
    b_, s, n = mask.shape
    return pl.pallas_call(
        _mask_norm_kernel,
        out_shape=jax.ShapeDtypeStruct((b_, n, n), F32),
        grid=(b_,),
        in_specs=[pl.BlockSpec((None, s, n), lambda b: (b, 0, 0))],
        out_specs=pl.BlockSpec((None, n, n), lambda b: (b, 0, 0)),
        compiler_params=_parallel(1),
    )(mask)


def pallas_opm_out(x2d, norm, p, mxu):
    b_, n, _, f = x2d.shape
    c_out = p['out_w'].shape[0]
    x2 = x2d.reshape(-1, f)
    ncol = norm.reshape(-1, 1)
    m = x2.shape[0]
    tm = _pick_row_tile(m, (f + c_out) * 4)
    out = pl.pallas_call(
        functools.partial(_opm_out_kernel, mxu=mxu),
        out_shape=jax.ShapeDtypeStruct((m, c_out), F32),
        grid=(m // tm,),
        in_specs=[
            pl.BlockSpec((tm, f), lambda i: (i, 0)),
            pl.BlockSpec((tm, 1), lambda i: (i, 0)),
            pl.BlockSpec((f, c_out), lambda i: (0, 0)),
            pl.BlockSpec((1, c_out), lambda i: (0, 0)),
        ],
        out_specs=pl.BlockSpec((tm, c_out), lambda i: (i, 0)),
        compiler_params=_parallel(1),
    )(x2, ncol, p['out_w'].T, p['out_b'].reshape(1, c_out))
    return out.reshape(b_, n, n, c_out)


def pallas_trimul_proj(act, mask, p, mxu):
    b_, n, _, c = act.shape
    mid = p['left_w'].shape[0]
    x2 = act.reshape(-1, c)
    mcol = mask.reshape(-1, 1)
    m = x2.shape[0]
    wcat = jnp.concatenate([p['left_w'], p['right_w'], p['lg_w'], p['rg_w'],
                            p['gating_w']], axis=0)                      # (4*mid + C, C)
    bcat = jnp.concatenate([p['left_b'], p['right_b'], p['lg_b'], p['rg_b'],
                            p['gating_b']]).reshape(1, -1)
    cw = wcat.shape[0]
    tm = _pick_row_tile(m, (c + cw) * 4)
    lr, gv = pl.pallas_call(
        functools.partial(_trimul_proj_kernel, mid=mid, mxu=mxu),
        out_shape=(jax.ShapeDtypeStruct((m, 2 * mid), F32),
                   jax.ShapeDtypeStruct((m, c), F32)),
        grid=(m // tm,),
        in_specs=[
            pl.BlockSpec((tm, c), lambda i: (i, 0)),
            pl.BlockSpec((tm, 1), lambda i: (i, 0)),
            pl.BlockSpec((1, c), lambda i: (0, 0)),
            pl.BlockSpec((1, c), lambda i: (0, 0)),
            pl.BlockSpec((c, cw), lambda i: (0, 0)),
            pl.BlockSpec((1, cw), lambda i: (0, 0)),
        ],
        out_specs=(pl.BlockSpec((tm, 2 * mid), lambda i: (i, 0)),
                   pl.BlockSpec((tm, c), lambda i: (i, 0))),
        compiler_params=_parallel(1),
    )(x2, mcol, p['ln_g'].reshape(1, c), p['ln_b'].reshape(1, c), wcat.T, bcat)
    return lr.reshape(b_, n, n, 2 * mid), gv.reshape(b_, n, n, c)


def pallas_trimul_core(lr, gv, p, outgoing, mxu):
    # TODO(synk): add query-row tiling for production N (demo loads the full (N,N,*) block).
    b_, n, _, two_mid = lr.shape
    mid = two_mid // 2
    c = gv.shape[-1]
    return pl.pallas_call(
        functools.partial(_trimul_core_kernel, mid=mid, outgoing=outgoing, mxu=mxu),
        out_shape=jax.ShapeDtypeStruct((b_, n, n, c), F32),
        grid=(b_,),
        in_specs=[
            pl.BlockSpec((None, n, n, two_mid), lambda b: (b, 0, 0, 0)),
            pl.BlockSpec((None, n, n, c), lambda b: (b, 0, 0, 0)),
            pl.BlockSpec((1, mid), lambda b: (0, 0)),
            pl.BlockSpec((1, mid), lambda b: (0, 0)),
            pl.BlockSpec((mid, c), lambda b: (0, 0)),
            pl.BlockSpec((1, c), lambda b: (0, 0)),
        ],
        out_specs=pl.BlockSpec((None, n, n, c), lambda b: (b, 0, 0, 0)),
        compiler_params=_parallel(1),
    )(lr, gv, p['cln_g'].reshape(1, mid), p['cln_b'].reshape(1, mid),
      p['out_w'].T, p['out_b'].reshape(1, c))


# ------------------------------ module forwards ----------------------------- #

def outer_product_mean(p, act, mask, mxu):
    b_, s, n, _ = act.shape
    mid = p['left_w'].shape[0]
    left, right = pallas_opm_proj(act, mask, p, mxu)                 # (B, S, N*mid) x 2
    m2 = pallas_opm_bmm(left, right, mxu)                            # (B, N*mid, N*mid)
    norm = pallas_mask_norm(mask)                                    # (B, N, N)
    # layout-only glue: M[(i,x),(j,y)] -> (b, i, j, (x,y))
    x2d = m2.reshape(b_, n, mid, n, mid).transpose(0, 1, 3, 2, 4).reshape(b_, n, n, mid * mid)
    return pallas_opm_out(x2d, norm, p, mxu)                         # (B, N, N, C_pair)


def row_attention_with_pair_bias(p, msa_act, pair_act, msa_mask, mxu):
    h, c = p['num_heads'], p['attn_c']
    hc = h * c
    pbias = pallas_pair_bias(pair_act, p['feat2d_ln_g'], p['feat2d_ln_b'], p['feat2d_w'], mxu)
    wcat = jnp.concatenate([p['q_w'], p['k_w'], p['v_w'], p['gate_w']], axis=0)
    bcat = jnp.concatenate([jnp.zeros((3 * hc,), F32), p['gate_b']])
    qkvg = pallas_ln_linear(msa_act, p['qn_g'], p['qn_b'], wcat, bcat, mxu)
    return pallas_mha(qkvg, msa_mask, pbias, p['out_w'], p['out_b'], h, c, mxu)


def extra_column_global_attention(p, msa_act, msa_mask, mxu):
    # NOTE: the reference forward transposes msa_mask but never uses it afterwards.
    del msa_mask
    m_t = jnp.swapaxes(msa_act, -2, -3)                              # (B, N, S, C)
    out_t = pallas_global_attention(m_t, p, mxu)                     # (B, N, S, C)
    return jnp.swapaxes(out_t, -2, -3)


def transition(p, act, mxu):
    return pallas_transition(act, p, mxu)


def triangle_multiplication(p, act, mask, outgoing, mxu):
    # TODO(synk): fuse_projection_weights=True branch not implemented (config uses False).
    lr, gate_vals = pallas_trimul_proj(act, mask, p, mxu)
    return pallas_trimul_core(lr, gate_vals, p, outgoing, mxu)


def triangle_attention(p, act, mask, starting, mxu):
    h, c = p['num_heads'], p['attn_c']
    hc = h * c
    if not starting:
        act = jnp.swapaxes(act, -2, -3)
        mask = jnp.swapaxes(mask, -1, -2)
    pbias = pallas_pair_bias(act, p['qn_g'], p['qn_b'], p['feat2d_w'], mxu)
    wcat = jnp.concatenate([p['q_w'], p['k_w'], p['v_w'], p['gate_w']], axis=0)
    bcat = jnp.concatenate([jnp.zeros((3 * hc,), F32), p['gate_b']])
    qkvg = pallas_ln_linear(act, p['qn_g'], p['qn_b'], wcat, bcat, mxu)
    out = pallas_mha(qkvg, mask, pbias, p['out_w'], p['out_b'], h, c, mxu)
    if not starting:
        out = jnp.swapaxes(out, -2, -3)
    return out


def frag_extra_stack_iteration(params, msa_act, pair_act, msa_mask, pair_mask, mxu_dtype=F32):
    pair_act = pair_act + outer_product_mean(params['opm'], msa_act, msa_mask, mxu_dtype)
    msa_act = msa_act + row_attention_with_pair_bias(params['row_attn'], msa_act, pair_act,
                                                     msa_mask, mxu_dtype)
    msa_act = msa_act + extra_column_global_attention(params['col_attn'], msa_act, msa_mask,
                                                      mxu_dtype)
    msa_act = msa_act + transition(params['msa_trans'], msa_act, mxu_dtype)
    pair_act = pair_act + triangle_multiplication(params['tri_out'], pair_act, pair_mask,
                                                  True, mxu_dtype)
    pair_act = pair_act + triangle_multiplication(params['tri_in'], pair_act, pair_mask,
                                                  False, mxu_dtype)
    pair_act = pair_act + triangle_attention(params['tri_att_start'], pair_act, pair_mask,
                                             True, mxu_dtype)
    pair_act = pair_act + triangle_attention(params['tri_att_end'], pair_act, pair_mask,
                                             False, mxu_dtype)
    pair_act = pair_act + transition(params['pair_trans'], pair_act, mxu_dtype)
    return msa_act, pair_act


# ------------------------------ parameter init ------------------------------ #

class _KeyGen:
    def __init__(self, key):
        self._key = key
        self._i = 0

    def __call__(self):
        self._i += 1
        return jax.random.fold_in(self._key, self._i)


def _lin_init(kg, c_out, c_in, bias=True):
    w = jax.random.normal(kg(), (c_out, c_in), F32) / math.sqrt(c_in)
    b = 0.02 * jax.random.normal(kg(), (c_out,), F32) if bias else None
    return w, b


def _ln_init(kg, c):
    return (1.0 + 0.1 * jax.random.normal(kg(), (c,), F32),
            0.02 * jax.random.normal(kg(), (c,), F32))


def init_params(key):
    kg = _KeyGen(key)
    params = {}

    p = {}
    p['ln_g'], p['ln_b'] = _ln_init(kg, C_MSA)
    p['left_w'], p['left_b'] = _lin_init(kg, OPM_MID, C_MSA)
    p['right_w'], p['right_b'] = _lin_init(kg, OPM_MID, C_MSA)
    p['out_w'], p['out_b'] = _lin_init(kg, C_PAIR, OPM_MID * OPM_MID)
    params['opm'] = p

    p = {'num_heads': ROW_HEADS, 'attn_c': ROW_ATTN_C}
    hc = ROW_HEADS * ROW_ATTN_C
    p['feat2d_ln_g'], p['feat2d_ln_b'] = _ln_init(kg, C_PAIR)
    p['feat2d_w'], _ = _lin_init(kg, ROW_HEADS, C_PAIR, bias=False)
    p['qn_g'], p['qn_b'] = _ln_init(kg, C_MSA)
    p['q_w'], _ = _lin_init(kg, hc, C_MSA, bias=False)
    p['k_w'], _ = _lin_init(kg, hc, C_MSA, bias=False)
    p['v_w'], _ = _lin_init(kg, hc, C_MSA, bias=False)
    p['gate_w'], p['gate_b'] = _lin_init(kg, hc, C_MSA)
    p['out_w'], p['out_b'] = _lin_init(kg, C_MSA, hc)
    params['row_attn'] = p

    p = {'num_heads': COL_HEADS, 'attn_c': COL_ATTN_C}
    hc = COL_HEADS * COL_ATTN_C
    p['qn_g'], p['qn_b'] = _ln_init(kg, C_MSA)
    p['q_w'], _ = _lin_init(kg, hc, C_MSA, bias=False)
    p['k_w'], _ = _lin_init(kg, COL_ATTN_C, C_MSA, bias=False)
    p['v_w'], _ = _lin_init(kg, COL_ATTN_C, C_MSA, bias=False)
    p['gate_w'], p['gate_b'] = _lin_init(kg, hc, C_MSA)
    p['out_w'], p['out_b'] = _lin_init(kg, C_MSA, hc)
    params['col_attn'] = p

    p = {}
    p['ln_g'], p['ln_b'] = _ln_init(kg, C_MSA)
    p['w1'], p['b1'] = _lin_init(kg, C_MSA * TRANSITION_FACTOR, C_MSA)
    p['w2'], p['b2'] = _lin_init(kg, C_MSA, C_MSA * TRANSITION_FACTOR)
    params['msa_trans'] = p

    for name in ('tri_out', 'tri_in'):
        p = {}
        p['ln_g'], p['ln_b'] = _ln_init(kg, C_PAIR)
        p['left_w'], p['left_b'] = _lin_init(kg, TRI_MID, C_PAIR)
        p['right_w'], p['right_b'] = _lin_init(kg, TRI_MID, C_PAIR)
        p['lg_w'], p['lg_b'] = _lin_init(kg, TRI_MID, C_PAIR)
        p['rg_w'], p['rg_b'] = _lin_init(kg, TRI_MID, C_PAIR)
        p['gating_w'], p['gating_b'] = _lin_init(kg, C_PAIR, C_PAIR)
        p['cln_g'], p['cln_b'] = _ln_init(kg, TRI_MID)
        p['out_w'], p['out_b'] = _lin_init(kg, C_PAIR, TRI_MID)
        params[name] = p

    for name in ('tri_att_start', 'tri_att_end'):
        p = {'num_heads': TRI_HEADS, 'attn_c': TRI_ATTN_C}
        hc = TRI_HEADS * TRI_ATTN_C
        p['qn_g'], p['qn_b'] = _ln_init(kg, C_PAIR)
        p['feat2d_w'], _ = _lin_init(kg, TRI_HEADS, C_PAIR, bias=False)
        p['q_w'], _ = _lin_init(kg, hc, C_PAIR, bias=False)
        p['k_w'], _ = _lin_init(kg, hc, C_PAIR, bias=False)
        p['v_w'], _ = _lin_init(kg, hc, C_PAIR, bias=False)
        p['gate_w'], p['gate_b'] = _lin_init(kg, hc, C_PAIR)
        p['out_w'], p['out_b'] = _lin_init(kg, C_PAIR, hc)
        params[name] = p

    p = {}
    p['ln_g'], p['ln_b'] = _ln_init(kg, C_PAIR)
    p['w1'], p['b1'] = _lin_init(kg, C_PAIR * TRANSITION_FACTOR, C_PAIR)
    p['w2'], p['b2'] = _lin_init(kg, C_PAIR, C_PAIR * TRANSITION_FACTOR)
    params['pair_trans'] = p

    return params


# --------------------------- plain-JAX reference ---------------------------- #

_HI = lax.Precision.HIGHEST


def _ln_ref(x, g, b):
    mu = jnp.mean(x, -1, keepdims=True)
    var = jnp.mean((x - mu) ** 2, -1, keepdims=True)
    return (x - mu) / jnp.sqrt(var + LN_EPS) * g + b


def _lin_ref(x, w, b=None):
    y = jnp.einsum('...i,oi->...o', x, w, precision=_HI)
    return y if b is None else y + b


def _softmax_ref(x):
    x = x - jnp.max(x, -1, keepdims=True)
    e = jnp.exp(x)
    return e / jnp.sum(e, -1, keepdims=True)


def ref_attention(m_q, m_kv, biases, p, H, c):
    q = _lin_ref(m_q, p['q_w']) / math.sqrt(c)
    k = _lin_ref(m_kv, p['k_w'])
    v = _lin_ref(m_kv, p['v_w'])
    q = q.reshape(q.shape[:-1] + (H, c))
    k = k.reshape(k.shape[:-1] + (H, c))
    v = v.reshape(v.shape[:-1] + (H, c))
    logits = jnp.einsum('...qhc,...khc->...hqk', q, k, precision=_HI)
    for b in biases:
        logits = logits + b
    a = _softmax_ref(logits)
    o = jnp.einsum('...hqk,...khc->...qhc', a, v, precision=_HI)
    g = jax.nn.sigmoid(_lin_ref(m_q, p['gate_w'], p['gate_b'])).reshape(o.shape)
    o = (o * g).reshape(o.shape[:-2] + (H * c,))
    return _lin_ref(o, p['out_w'], p['out_b'])


def ref_opm(p, act, mask):
    act = _ln_ref(act, p['ln_g'], p['ln_b'])
    mask = mask[..., None]
    left = mask * _lin_ref(act, p['left_w'], p['left_b'])
    right = mask * _lin_ref(act, p['right_w'], p['right_b'])
    x2d = jnp.einsum('bmix,bmjy->bjixy', left, right, precision=_HI)
    B, Nj, Ni, mid, _ = x2d.shape
    out = _lin_ref(x2d.reshape(B, Nj, Ni, mid * mid), p['out_w'], p['out_b'])
    out = jnp.swapaxes(out, -2, -3)
    norm = jnp.einsum('...abc,...adc->...bdc', mask, mask, precision=_HI)
    return out / (norm + 1e-3)


def ref_row_attn(p, msa_act, pair_act, msa_mask):
    z = _ln_ref(pair_act, p['feat2d_ln_g'], p['feat2d_ln_b'])
    z = _lin_ref(z, p['feat2d_w'])
    z = jnp.transpose(z, (0, 3, 1, 2))[:, None]
    bias = (1e9 * (msa_mask - 1.0))[:, :, None, None, :]
    m = _ln_ref(msa_act, p['qn_g'], p['qn_b'])
    return ref_attention(m, m, [bias, z], p, p['num_heads'], p['attn_c'])


def ref_col_attn(p, msa_act, msa_mask):
    H, c = p['num_heads'], p['attn_c']
    m = jnp.swapaxes(msa_act, -2, -3)
    m = _ln_ref(m, p['qn_g'], p['qn_b'])
    q_avg = jnp.sum(m, axis=-2) / m.shape[-2]
    q = _lin_ref(q_avg, p['q_w']).reshape(q_avg.shape[:-1] + (H, c)) * (c ** -0.5)
    k = _lin_ref(m, p['k_w'])
    v = _lin_ref(m, p['v_w'])
    gate = jax.nn.sigmoid(_lin_ref(m, p['gate_w'], p['gate_b'])).reshape(m.shape[:-1] + (H, c))
    w = _softmax_ref(jnp.einsum('bihc,bikc->bihk', q, k, precision=_HI))
    out_1d = jnp.einsum('bmhk,bmkc->bmhc', w, v, precision=_HI)
    out_1d = out_1d[:, :, None] * gate
    out = _lin_ref(out_1d.reshape(out_1d.shape[:-2] + (H * c,)), p['out_w'], p['out_b'])
    return jnp.swapaxes(out, -2, -3)


def ref_transition(p, act):
    act = _ln_ref(act, p['ln_g'], p['ln_b'])
    act = jax.nn.relu(_lin_ref(act, p['w1'], p['b1']))
    return _lin_ref(act, p['w2'], p['b2'])


def ref_tri_mul(p, act, mask, outgoing):
    act = _ln_ref(act, p['ln_g'], p['ln_b'])
    mask = mask[..., None]
    left = mask * _lin_ref(act, p['left_w'], p['left_b']) * jax.nn.sigmoid(
        _lin_ref(act, p['lg_w'], p['lg_b']))
    right = mask * _lin_ref(act, p['right_w'], p['right_b']) * jax.nn.sigmoid(
        _lin_ref(act, p['rg_w'], p['rg_b']))
    gate = _lin_ref(act, p['gating_w'], p['gating_b'])
    if outgoing:
        out = jnp.einsum('bikc,bjkc->bijc', left, right, precision=_HI)
    else:
        out = jnp.einsum('bkjc,bkic->bijc', left, right, precision=_HI)
    out = _ln_ref(out, p['cln_g'], p['cln_b'])
    out = _lin_ref(out, p['out_w'], p['out_b'])
    return out * jax.nn.sigmoid(gate)


def ref_tri_attn(p, act, mask, starting):
    if not starting:
        act = jnp.swapaxes(act, -2, -3)
        mask = jnp.swapaxes(mask, -1, -2)
    act_n = _ln_ref(act, p['qn_g'], p['qn_b'])
    bias = (1e9 * (mask - 1.0))[:, :, None, None, :]
    nb = _lin_ref(act_n, p['feat2d_w'])
    nb = jnp.transpose(nb, (0, 3, 1, 2))[:, None]
    out = ref_attention(act_n, act_n, [bias, nb], p, p['num_heads'], p['attn_c'])
    if not starting:
        out = jnp.swapaxes(out, -2, -3)
    return out


def ref_forward(params, msa_act, pair_act, msa_mask, pair_mask):
    pair_act = pair_act + ref_opm(params['opm'], msa_act, msa_mask)
    msa_act = msa_act + ref_row_attn(params['row_attn'], msa_act, pair_act, msa_mask)
    msa_act = msa_act + ref_col_attn(params['col_attn'], msa_act, msa_mask)
    msa_act = msa_act + ref_transition(params['msa_trans'], msa_act)
    pair_act = pair_act + ref_tri_mul(params['tri_out'], pair_act, pair_mask, True)
    pair_act = pair_act + ref_tri_mul(params['tri_in'], pair_act, pair_mask, False)
    pair_act = pair_act + ref_tri_attn(params['tri_att_start'], pair_act, pair_mask, True)
    pair_act = pair_act + ref_tri_attn(params['tri_att_end'], pair_act, pair_mask, False)
    pair_act = pair_act + ref_transition(params['pair_trans'], pair_act)
    return msa_act, pair_act


# ----------------------------------- main ----------------------------------- #

if __name__ == "__main__":
    key = jax.random.PRNGKey(0)
    k_params, k_msa, k_pair, k_mm, k_pm = jax.random.split(key, 5)
    params = init_params(k_params)

    msa_act = jax.random.normal(k_msa, (BATCH, N_EXTRA_SEQ, N_RES, C_MSA), F32)
    pair_act = jax.random.normal(k_pair, (BATCH, N_RES, N_RES, C_PAIR), F32)
    msa_mask = (jax.random.uniform(k_mm, (BATCH, N_EXTRA_SEQ, N_RES)) > 0.15).astype(F32)
    pair_mask = (jax.random.uniform(k_pm, (BATCH, N_RES, N_RES)) > 0.15).astype(F32)

    ref_msa, ref_pair = ref_forward(params, msa_act, pair_act, msa_mask, pair_mask)

    # --- f32-MXU path: strict check against the plain-JAX reference -------------------- #
    out_msa, out_pair = frag_extra_stack_iteration(
        params, msa_act, pair_act, msa_mask, pair_mask, F32)
    out_msa = jax.block_until_ready(out_msa)
    out_pair = jax.block_until_ready(out_pair)

    assert out_msa.shape == (BATCH, N_EXTRA_SEQ, N_RES, C_MSA)
    assert out_pair.shape == (BATCH, N_RES, N_RES, C_PAIR)
    assert bool(jnp.all(jnp.isfinite(out_msa))) and bool(jnp.all(jnp.isfinite(out_pair)))
    assert jnp.allclose(out_msa, ref_msa, atol=1e-2, rtol=1e-2), \
        float(jnp.max(jnp.abs(out_msa - ref_msa)))
    assert jnp.allclose(out_pair, ref_pair, atol=1e-2, rtol=1e-2), \
        float(jnp.max(jnp.abs(out_pair - ref_pair)))

    # --- bf16-MXU fast path (v6e/v7x): loose sanity check ------------------------------ #
    bf_msa, bf_pair = frag_extra_stack_iteration(
        params, msa_act, pair_act, msa_mask, pair_mask, jnp.bfloat16)
    bf_msa = jax.block_until_ready(bf_msa)
    bf_pair = jax.block_until_ready(bf_pair)
    assert bool(jnp.all(jnp.isfinite(bf_msa))) and bool(jnp.all(jnp.isfinite(bf_pair)))
    assert float(jnp.max(jnp.abs(bf_msa - ref_msa))) < 0.5
    assert float(jnp.max(jnp.abs(bf_pair - ref_pair))) < 0.5

    print("KERNEL_OK")
</pallas_src>

<mosaic_0001>
module attributes {stable_mosaic.version = 11 : i64} {
  func.func @_opm_proj_kernel(%arg0: i32, %arg1: memref<128x32xf32, #tpu.memory_space<vmem>>, %arg2: memref<128x1xf32, #tpu.memory_space<vmem>>, %arg3: memref<1x32xf32, #tpu.memory_space<vmem>>, %arg4: memref<1x32xf32, #tpu.memory_space<vmem>>, %arg5: memref<32x16xf32, #tpu.memory_space<vmem>>, %arg6: memref<1x16xf32, #tpu.memory_space<vmem>>, %arg7: memref<128x8xf32, #tpu.memory_space<vmem>>, %arg8: memref<128x8xf32, #tpu.memory_space<vmem>>) attributes {dimension_semantics = [#tpu.dimension_semantics<parallel>], iteration_bounds = array<i64: 2>, scalar_prefetch = 0 : i64, scratch_operands = 0 : i64, tpu.core_type = #tpu.core_type<tc>, window_params = [{transform_indices = @transform_0, window_bounds = array<i64: 128, 32>}, {transform_indices = @transform_1, window_bounds = array<i64: 128, 1>}, {pipeline_mode = #tpu.pipeline_mode<synchronous>, transform_indices = @transform_2, window_bounds = array<i64: 1, 32>}, {pipeline_mode = #tpu.pipeline_mode<synchronous>, transform_indices = @transform_3, window_bounds = array<i64: 1, 32>}, {pipeline_mode = #tpu.pipeline_mode<synchronous>, transform_indices = @transform_4, window_bounds = array<i64: 32, 16>}, {pipeline_mode = #tpu.pipeline_mode<synchronous>, transform_indices = @transform_5, window_bounds = array<i64: 1, 16>}, {transform_indices = @transform_6, window_bounds = array<i64: 128, 8>}, {transform_indices = @transform_7, window_bounds = array<i64: 128, 8>}]} {
    %c0 = arith.constant 0 : index
    %c0_0 = arith.constant 0 : index
    %0 = vector.load %arg1[%c0, %c0_0] : memref<128x32xf32, #tpu.memory_space<vmem>>, vector<128x32xf32>
    %c0_1 = arith.constant 0 : index
    %c0_2 = arith.constant 0 : index
    %1 = vector.load %arg3[%c0_1, %c0_2] : memref<1x32xf32, #tpu.memory_space<vmem>>, vector<1x32xf32>
    %c0_3 = arith.constant 0 : index
    %c0_4 = arith.constant 0 : index
    %2 = vector.load %arg4[%c0_3, %c0_4] : memref<1x32xf32, #tpu.memory_space<vmem>>, vector<1x32xf32>
    %cst = arith.constant dense<0.000000e+00> : vector<128xf32>
    %3 = vector.multi_reduction <add>, %0, %cst [1] : vector<128x32xf32> to vector<128xf32>
    %4 = vector.shape_cast %3 : vector<128xf32> to vector<128x1xf32>
    %cst_5 = arith.constant 3.200000e+01 : f32
    %5 = vector.broadcast %cst_5 : f32 to vector<128x1xf32>
    %6 = arith.divf %4, %5 : vector<128x1xf32>
    %7 = vector.broadcast %6 : vector<128x1xf32> to vector<128x32xf32>
    %8 = arith.subf %0, %7 : vector<128x32xf32>
    %9 = arith.mulf %8, %8 : vector<128x32xf32>
    %cst_6 = arith.constant dense<0.000000e+00> : vector<128xf32>
    %10 = vector.multi_reduction <add>, %9, %cst_6 [1] : vector<128x32xf32> to vector<128xf32>
    %11 = vector.shape_cast %10 : vector<128xf32> to vector<128x1xf32>
    %cst_7 = arith.constant 3.200000e+01 : f32
    %12 = vector.broadcast %cst_7 : f32 to vector<128x1xf32>
    %13 = arith.divf %11, %12 : vector<128x1xf32>
    %cst_8 = arith.constant 9.99999974E-6 : f32
    %14 = vector.broadcast %cst_8 : f32 to vector<128x1xf32>
    %15 = arith.addf %13, %14 : vector<128x1xf32>
    %16 = math.rsqrt %15 : vector<128x1xf32>
    %17 = vector.broadcast %16 : vector<128x1xf32> to vector<128x32xf32>
    %18 = arith.mulf %8, %17 : vector<128x32xf32>
    %19 = vector.broadcast %1 : vector<1x32xf32> to vector<128x32xf32>
    %20 = arith.mulf %18, %19 : vector<128x32xf32>
    %21 = vector.broadcast %2 : vector<1x32xf32> to vector<128x32xf32>
    %22 = arith.addf %20, %21 : vector<128x32xf32>
    %c0_9 = arith.constant 0 : index
    %c0_10 = arith.constant 0 : index
    %23 = vector.load %arg5[%c0_9, %c0_10] : memref<32x16xf32, #tpu.memory_space<vmem>>, vector<32x16xf32>
    %cst_11 = arith.constant dense<0.000000e+00> : vector<128x16xf32>
    %24 = tpu.matmul %22, %23, %cst_11 {dimension_numbers = #tpu.dot_dimension_numbers<[1], [0], [0], [1], [0, 0, 1, 1], [], []>} : vector<128x32xf32>, vector<32x16xf32>, vector<128x16xf32> -> vector<128x16xf32>
    %c0_12 = arith.constant 0 : index
    %c0_13 = arith.constant 0 : index
    %25 = vector.load %arg6[%c0_12, %c0_13] : memref<1x16xf32, #tpu.memory_space<vmem>>, vector<1x16xf32>
    %26 = vector.broadcast %25 : vector<1x16xf32> to vector<128x16xf32>
    %27 = arith.addf %24, %26 : vector<128x16xf32>
    %c0_14 = arith.constant 0 : index
    %c0_15 = arith.constant 0 : index
    %28 = vector.load %arg2[%c0_14, %c0_15] : memref<128x1xf32, #tpu.memory_space<vmem>>, vector<128x1xf32>
    %29 = vector.broadcast %28 : vector<128x1xf32> to vector<128x16xf32>
    %30 = arith.mulf %29, %27 : vector<128x16xf32>
    %31 = vector.extract_strided_slice %30 {offsets = [0, 0], sizes = [128, 8], strides = [1, 1]} : vector<128x16xf32> to vector<128x8xf32>
    %c0_16 = arith.constant 0 : index
    %c0_17 = arith.constant 0 : index
    %32 = vector.load %arg7[%c0_16, %c0_17] : memref<128x8xf32, #tpu.memory_space<vmem>>, vector<128x8xf32>
    tpu.vector_store %arg7[%c0_16, %c0_17], %31 {strides = array<i32>} : memref<128x8xf32, #tpu.memory_space<vmem>>, vector<128x8xf32>,
    %33 = vector.extract_strided_slice %30 {offsets = [0, 8], sizes = [128, 8], strides = [1, 1]} : vector<128x16xf32> to vector<128x8xf32>
    %c0_18 = arith.constant 0 : index
    %c0_19 = arith.constant 0 : index
    %34 = vector.load %arg8[%c0_18, %c0_19] : memref<128x8xf32, #tpu.memory_space<vmem>>, vector<128x8xf32>
    tpu.vector_store %arg8[%c0_18, %c0_19], %33 {strides = array<i32>} : memref<128x8xf32, #tpu.memory_space<vmem>>, vector<128x8xf32>,
    return
  }
  func.func @transform_0(%arg0: i32) -> (i32, i32) {
    %c0_i32 = arith.constant 0 : i32
    %c0_i32_0 = arith.constant 0 : i32
    return %arg0, %c0_i32 : i32, i32
  }
  func.func @transform_1(%arg0: i32) -> (i32, i32) {
    %c0_i32 = arith.constant 0 : i32
    %c0_i32_0 = arith.constant 0 : i32
    return %arg0, %c0_i32 : i32, i32
  }
  func.func @transform_2(%arg0: i32) -> (i32, i32) {
    %c0_i32 = arith.constant 0 : i32
    %c0_i32_0 = arith.constant 0 : i32
    %c0_i32_1 = arith.constant 0 : i32
    return %c0_i32, %c0_i32_0 : i32, i32
  }
  func.func @transform_3(%arg0: i32) -> (i32, i32) {
    %c0_i32 = arith.constant 0 : i32
    %c0_i32_0 = arith.constant 0 : i32
    %c0_i32_1 = arith.constant 0 : i32
    return %c0_i32, %c0_i32_0 : i32, i32
  }
  func.func @transform_4(%arg0: i32) -> (i32, i32) {
    %c0_i32 = arith.constant 0 : i32
    %c0_i32_0 = arith.constant 0 : i32
    %c0_i32_1 = arith.constant 0 : i32
    return %c0_i32, %c0_i32_0 : i32, i32
  }
  func.func @transform_5(%arg0: i32) -> (i32, i32) {
    %c0_i32 = arith.constant 0 : i32
    %c0_i32_0 = arith.constant 0 : i32
    %c0_i32_1 = arith.constant 0 : i32
    return %c0_i32, %c0_i32_0 : i32, i32
  }
  func.func @transform_6(%arg0: i32) -> (i32, i32) {
    %c0_i32 = arith.constant 0 : i32
    %c0_i32_0 = arith.constant 0 : i32
    return %arg0, %c0_i32 : i32, i32
  }
  func.func @transform_7(%arg0: i32) -> (i32, i32) {
    %c0_i32 = arith.constant 0 : i32
    %c0_i32_0 = arith.constant 0 : i32
    return %arg0, %c0_i32 : i32, i32
  }
}

</mosaic_0001>

<llo_original>
// kernel: tpu_custom_call.1
$region0: #{tpu_custom_call.1}
  #allocation0 [shape = 'u32[]', space=smem, size = 0x4, offset = 0x4, fixed_abs, tag = 'smem constant byte address 0x4 - core index']
  #allocation1 [shape = 'u32[144,128]{1,0:T(1,128)}', space=vmem, size = 0x12000, scoped, tag = 'internal scratch']
  %s0 = inlined_call_operand.vmem [shape: f32[256,32], index: 0, kind: input, shape index: {}]
  %s1 = inlined_call_operand.vmem [shape: f32[256,1], index: 1, kind: input, shape index: {}]
  %s2 = inlined_call_operand.vmem [shape: f32[1,32], index: 2, kind: input, shape index: {}]
  %s3 = inlined_call_operand.vmem [shape: f32[1,32], index: 3, kind: input, shape index: {}]
  %s4 = inlined_call_operand.vmem [shape: f32[32,16], index: 4, kind: input, shape index: {}]
  %s5 = inlined_call_operand.vmem [shape: f32[1,16], index: 5, kind: input, shape index: {}]
  %s6 = inlined_call_operand.vmem [shape: f32[256,8], index: 6, kind: output, shape index: {0}]
  %s7 = inlined_call_operand.vmem [shape: f32[256,8], index: 7, kind: output, shape index: {1}]
  %8 = xla_tuple %s6, %s7
  %s9 = sld [smem:[#allocation0]]
  $region65: #{tpu_custom_call.1} parent=0
    _
  %s11 = ssub.s32 1, %s9
  %s12 = scalar_select 0, %s11, %s9
  loop: start=0, step=1, limit=4
  $region2: #{tpu_custom_call.1} parent=0 // loop_pre_header
    _
  $region3: #{tpu_custom_call.1} parent=0 // loop_header
    %s14 = sphi 0, %s18
    %p15 = scmp.ge.s32.totalorder %s14, 4
    %s24 = sphi 0, %s26
    %s27 = sphi 0, %s24
    %s28 = sphi 0, %s27
    %s44 = sphi 0, %s28
    %s50 = sphi 0, %s52
    %s53 = sphi 0, %s50
    %s54 = sphi 0, %s53
    %s70 = sphi 0, %s54
    %s74 = sphi 0, %s74
    %s76 = sphi 0, %s74
    %s77 = sphi 0, %s76
    %s91 = sphi 0, %s77
    %s95 = sphi 0, %s95
    %s97 = sphi 0, %s95
    %s98 = sphi 0, %s97
    %s112 = sphi 0, %s98
    %s116 = sphi 0, %s116
    %s118 = sphi 0, %s116
    %s119 = sphi 0, %s118
    %s133 = sphi 0, %s119
    %s137 = sphi 0, %s137
    %s139 = sphi 0, %s137
    %s140 = sphi 0, %s139
    %s154 = sphi 0, %s140
    %s160 = sphi 0, %s162
    %s163 = sphi 0, %s160
    %s164 = sphi 0, %s163
    %s180 = sphi 0, %s164
    %s186 = sphi 0, %s188
    %s189 = sphi 0, %s186
    %s190 = sphi 0, %s189
    %s206 = sphi 0, %s190
  $region4: #{tpu_custom_call.1} parent=0 // loop_header_branch
    %17 = sbr.rel (%p15) target = $region8
  $region5: #{tpu_custom_call.1} parent=0 // loop_body
    %s19 = ssub.s32 %s14, 1
    %s20 = ssub.s32 %s14, 2
    %s21 = sadd.s32 %s14, 1
    %s22 = ssub.s32 %s14, %s21
    %p23 = scmp.eq.s32.totalorder %s22, 0
    %s25 = sadd.s32 %s24, 1
    %s26 = scalar_select %p23, %s24, %s25
    %p29 = pneg %p23
    %p30 = scmp.eq.s32.totalorder %s14, 1
    %p31 = por %p29, %p30
    %p32 = scmp.ne.s32.totalorder %s24, %s27
    %p33 = scmp.eq.s32.totalorder %s14, 0
    %p34 = por %p32, %p33
    %p35 = scmp.ne.s32.totalorder %s24, %s27
    %p36 = scmp.eq.s32.totalorder %s19, 1
    %p37 = por %p35, %p36
    %p38 = scmp.ne.s32.totalorder %s27, %s28
    %p39 = scmp.eq.s32.totalorder %s19, 0
    %p40 = por %p38, %p39
    %p41 = scmp.ne.s32.totalorder %s27, %s28
    %p42 = scmp.eq.s32.totalorder %s20, 1
    %p43 = por %p41, %p42
    %p45 = scmp.ne.s32.totalorder %s28, %s44
    %p46 = scmp.eq.s32.totalorder %s20, 0
    %p47 = por %p45, %p46
    %s48 = ssub.s32 %s14, %s21
    %p49 = scmp.eq.s32.totalorder %s48, 0
    %s51 = sadd.s32 %s50, 1
    %s52 = scalar_select %p49, %s50, %s51
    %p55 = pneg %p49
    %p56 = scmp.eq.s32.totalorder %s14, 1
    %p57 = por %p55, %p56
    %p58 = scmp.ne.s32.totalorder %s50, %s53
    %p59 = scmp.eq.s32.totalorder %s14, 0
    %p60 = por %p58, %p59
    %p61 = scmp.ne.s32.totalorder %s50, %s53
    %p62 = scmp.eq.s32.totalorder %s19, 1
    %p63 = por %p61, %p62
    %p64 = scmp.ne.s32.totalorder %s53, %s54
    %p65 = scmp.eq.s32.totalorder %s19, 0
    %p66 = por %p64, %p65
    %p67 = scmp.ne.s32.totalorder %s53, %s54
    %p68 = scmp.eq.s32.totalorder %s20, 1
    %p69 = por %p67, %p68
    %p71 = scmp.ne.s32.totalorder %s54, %s70
    %p72 = scmp.eq.s32.totalorder %s20, 0
    %p73 = por %p71, %p72
    %s75 = sadd.s32 %s74, 1
    %p78 = scmp.eq.s32.totalorder %s14, 1
    %p79 = scmp.ne.s32.totalorder %s74, %s76
    %p80 = scmp.eq.s32.totalorder %s14, 0
    %p81 = por %p79, %p80
    %p82 = scmp.ne.s32.totalorder %s74, %s76
    %p83 = scmp.eq.s32.totalorder %s19, 1
    %p84 = por %p82, %p83
    %p85 = scmp.ne.s32.totalorder %s76, %s77
    %p86 = scmp.eq.s32.totalorder %s19, 0
    %p87 = por %p85, %p86
    %p88 = scmp.ne.s32.totalorder %s76, %s77
    %p89 = scmp.eq.s32.totalorder %s20, 1
    %p90 = por %p88, %p89
    %p92 = scmp.ne.s32.totalorder %s77, %s91
    %p93 = scmp.eq.s32.totalorder %s20, 0
    %p94 = por %p92, %p93
    %s96 = sadd.s32 %s95, 1
    %p99 = scmp.eq.s32.totalorder %s14, 1
    %p100 = scmp.ne.s32.totalorder %s95, %s97
    %p101 = scmp.eq.s32.totalorder %s14, 0
    %p102 = por %p100, %p101
    %p103 = scmp.ne.s32.totalorder %s95, %s97
    %p104 = scmp.eq.s32.totalorder %s19, 1
    %p105 = por %p103, %p104
    %p106 = scmp.ne.s32.totalorder %s97, %s98
    %p107 = scmp.eq.s32.totalorder %s19, 0
    %p108 = por %p106, %p107
    %p109 = scmp.ne.s32.totalorder %s97, %s98
    %p110 = scmp.eq.s32.totalorder %s20, 1
    %p111 = por %p109, %p110
    %p113 = scmp.ne.s32.totalorder %s98, %s112
    %p114 = scmp.eq.s32.totalorder %s20, 0
    %p115 = por %p113, %p114
    %s117 = sadd.s32 %s116, 1
    %p120 = scmp.eq.s32.totalorder %s14, 1
    %p121 = scmp.ne.s32.totalorder %s116, %s118
    %p122 = scmp.eq.s32.totalorder %s14, 0
    %p123 = por %p121, %p122
    %p124 = scmp.ne.s32.totalorder %s116, %s118
    %p125 = scmp.eq.s32.totalorder %s19, 1
    %p126 = por %p124, %p125
    %p127 = scmp.ne.s32.totalorder %s118, %s119
    %p128 = scmp.eq.s32.totalorder %s19, 0
    %p129 = por %p127, %p128
    %p130 = scmp.ne.s32.totalorder %s118, %s119
    %p131 = scmp.eq.s32.totalorder %s20, 1
    %p132 = por %p130, %p131
    %p134 = scmp.ne.s32.totalorder %s119, %s133
    %p135 = scmp.eq.s32.totalorder %s20, 0
    %p136 = por %p134, %p135
    %s138 = sadd.s32 %s137, 1
    %p141 = scmp.eq.s32.totalorder %s14, 1
    %p142 = scmp.ne.s32.totalorder %s137, %s139
    %p143 = scmp.eq.s32.totalorder %s14, 0
    %p144 = por %p142, %p143
    %p145 = scmp.ne.s32.totalorder %s137, %s139
    %p146 = scmp.eq.s32.totalorder %s19, 1
    %p147 = por %p145, %p146
    %p148 = scmp.ne.s32.totalorder %s139, %s140
    %p149 = scmp.eq.s32.totalorder %s19, 0
    %p150 = por %p148, %p149
    %p151 = scmp.ne.s32.totalorder %s139, %s140
    %p152 = scmp.eq.s32.totalorder %s20, 1
    %p153 = por %p151, %p152
    %p155 = scmp.ne.s32.totalorder %s140, %s154
    %p156 = scmp.eq.s32.totalorder %s20, 0
    %p157 = por %p155, %p156
    %s158 = ssub.s32 %s14, %s21
    %p159 = scmp.eq.s32.totalorder %s158, 0
    %s161 = sadd.s32 %s160, 1
    %s162 = scalar_select %p159, %s160, %s161
    %p165 = pneg %p159
    %p166 = scmp.eq.s32.totalorder %s14, 1
    %p167 = por %p165, %p166
    %p168 = scmp.ne.s32.totalorder %s160, %s163
    %p169 = scmp.eq.s32.totalorder %s14, 0
    %p170 = por %p168, %p169
    %p171 = scmp.ne.s32.totalorder %s160, %s163
    %p172 = scmp.eq.s32.totalorder %s19, 1
    %p173 = por %p171, %p172
    %p174 = scmp.ne.s32.totalorder %s163, %s164
    %p175 = scmp.eq.s32.totalorder %s19, 0
    %p176 = por %p174, %p175
    %p177 = scmp.ne.s32.totalorder %s163, %s164
    %p178 = scmp.eq.s32.totalorder %s20, 1
    %p179 = por %p177, %p178
    %p181 = scmp.ne.s32.totalorder %s164, %s180
    %p182 = scmp.eq.s32.totalorder %s20, 0
    %p183 = por %p181, %p182
    %s184 = ssub.s32 %s14, %s21
    %p185 = scmp.eq.s32.totalorder %s184, 0
    %s187 = sadd.s32 %s186, 1
    %s188 = scalar_select %p185, %s186, %s187
    %p191 = pneg %p185
    %p192 = scmp.eq.s32.totalorder %s14, 1
    %p193 = por %p191, %p192
    %p194 = scmp.ne.s32.totalorder %s186, %s189
    %p195 = scmp.eq.s32.totalorder %s14, 0
    %p196 = por %p194, %p195
    %p197 = scmp.ne.s32.totalorder %s186, %s189
    %p198 = scmp.eq.s32.totalorder %s19, 1
    %p199 = por %p197, %p198
    %p200 = scmp.ne.s32.totalorder %s189, %s190
    %p201 = scmp.eq.s32.totalorder %s19, 0
    %p202 = por %p200, %p201
    %p203 = scmp.ne.s32.totalorder %s189, %s190
    %p204 = scmp.eq.s32.totalorder %s20, 1
    %p205 = por %p203, %p204
    %p207 = scmp.ne.s32.totalorder %s190, %s206
    %p208 = scmp.eq.s32.totalorder %s20, 0
    %p209 = por %p207, %p208
    %p210 = scmp.le.s32.totalorder 1, %s14
    %p211 = scmp.lt.s32.totalorder %s14, 3
    %p212 = pnand %p210, %p211
    %p213 = pneg %p212
    // Predicated region
    $region9: #{tpu_custom_call.1} parent=5 // pred_check
      _
    $region10: #{tpu_custom_call.1} parent=5 // pred_check_branch
      %215 = sbr.rel (%p212) target = $region12
    $region11: #{tpu_custom_call.1} parent=5 // pred_region
      %s216 = ssub.s32 %s14, 1
      // Predicated region
      $region13: #{tpu_custom_call.1} parent=11 // pred_check
        %p217 = pneg %p87
      $region14: #{tpu_custom_call.1} parent=11 // pred_check_branch
        %219 = sbr.rel (%p217) target = $region16
      $region15: #{tpu_custom_call.1} parent=11 // pred_region
        _
      $region16: #{tpu_custom_call.1} parent=11 // pred_fallthru
        _
      // Predicated region
      $region17: #{tpu_custom_call.1} parent=11 // pred_check
        %p220 = pneg %p108
      $region18: #{tpu_custom_call.1} parent=11 // pred_check_branch
        %222 = sbr.rel (%p220) target = $region20
      $region19: #{tpu_custom_call.1} parent=11 // pred_region
        _
      $region20: #{tpu_custom_call.1} parent=11 // pred_fallthru
        _
      // Predicated region
      $region21: #{tpu_custom_call.1} parent=11 // pred_check
        %p223 = pneg %p129
      $region22: #{tpu_custom_call.1} parent=11 // pred_check_branch
        %225 = sbr.rel (%p223) target = $region24
      $region23: #{tpu_custom_call.1} parent=11 // pred_region
        _
      $region24: #{tpu_custom_call.1} parent=11 // pred_fallthru
        _
      // Predicated region
      $region25: #{tpu_custom_call.1} parent=11 // pred_check
        %p226 = pneg %p150
      $region26: #{tpu_custom_call.1} parent=11 // pred_check_branch
        %228 = sbr.rel (%p226) target = $region28
      $region27: #{tpu_custom_call.1} parent=11 // pred_region
        _
      $region28: #{tpu_custom_call.1} parent=11 // pred_fallthru
        _
    $region12: #{tpu_custom_call.1} parent=5 // pred_fallthru
      _
    %p229 = scmp.lt.s32.totalorder %s14, 2
    // Predicated region
    $region29: #{tpu_custom_call.1} parent=5 // pred_check
      %p230 = pneg %p229
    $region30: #{tpu_custom_call.1} parent=5 // pred_check_branch
      %232 = sbr.rel (%p230) target = $region32
    $region31: #{tpu_custom_call.1} parent=5 // pred_region
      // Predicated region
      $region33: #{tpu_custom_call.1} parent=31 // pred_check
        %p233 = pneg %p34
      $region34: #{tpu_custom_call.1} parent=31 // pred_check_branch
        %235 = sbr.rel (%p233) target = $region36
      $region35: #{tpu_custom_call.1} parent=31 // pred_region
        %s236 = smul.u32 16, %s14
        %p237 = scmp.lt.s32.totalorder %s236, 31
        %s238 = scalar_select %p237, %s236, 31
        %s239 = smul.addr %s238, 8
        %s240 = scalar_lea.vmem %s0, %s239
        %s241 = smul.u32 16, %s14
      $region36: #{tpu_custom_call.1} parent=31 // pred_fallthru
        _
      // Predicated region
      $region37: #{tpu_custom_call.1} parent=31 // pred_check
        %p242 = pneg %p60
      $region38: #{tpu_custom_call.1} parent=31 // pred_check_branch
        %244 = sbr.rel (%p242) target = $region40
      $region39: #{tpu_custom_call.1} parent=31 // pred_region
        %s245 = smul.u32 16, %s14
        %p246 = scmp.lt.s32.totalorder %s245, 31
        %s247 = scalar_select %p246, %s245, 31
        %s248 = smul.addr %s247, 8
        %s249 = scalar_lea.vmem %s1, %s248
        %s250 = smul.u32 16, %s14
      $region40: #{tpu_custom_call.1} parent=31 // pred_fallthru
        _
    $region32: #{tpu_custom_call.1} parent=5 // pred_fallthru
      _
    %p251 = scmp.le.s32.totalorder 1, %s14
    %p252 = scmp.lt.s32.totalorder %s14, 3
    %p253 = pnand %p251, %p252
    %p254 = pneg %p253
    // Predicated region
    $region41: #{tpu_custom_call.1} parent=5 // pred_check
      _
    $region42: #{tpu_custom_call.1} parent=5 // pred_check_branch
      %256 = sbr.rel (%p253) target = $region44
    $region43: #{tpu_custom_call.1} parent=5 // pred_region
      %s257 = ssub.s32 %s14, 1
      %s258 = smul.u32 16, %s19
      %p259 = scmp.lt.s32.totalorder %s258, 31
      %s260 = scalar_select %p259, %s258, 31
      %s261 = smul.addr %s260, 8
      %s262 = scalar_lea.vmem %s0, %s261
      %p263 = pneg %p40
      %p264 = pneg %p37
      %s265 = smul.u32 16, %s19
      %p266 = scmp.lt.s32.totalorder %s265, 31
      %s267 = scalar_select %p266, %s265, 31
      %s268 = smul.addr %s267, 8
      %s269 = scalar_lea.vmem %s1, %s268
      %p270 = pneg %p66
      %p271 = pneg %p63
      %p272 = pneg %p87
      %p273 = pneg %p84
      %p274 = pneg %p108
      %p275 = pneg %p105
      %p276 = pneg %p129
      %p277 = pneg %p126
      %p278 = pneg %p150
      %p279 = pneg %p147
      %p280 = pneg %p176
      %p281 = pneg %p173
      %s282 = smul.u32 16, %s19
      %p283 = scmp.lt.s32.totalorder %s282, 31
      %s284 = scalar_select %p283, %s282, 31
      %s285 = smul.addr %s284, 8
      %s286 = scalar_lea.vmem %s6, %s285
      %p287 = pneg %p202
      %p288 = pneg %p199
      %s289 = smul.u32 16, %s19
      %p290 = scmp.lt.s32.totalorder %s289, 31
      %s291 = scalar_select %p290, %s289, 31
      %s292 = smul.addr %s291, 8
      %s293 = scalar_lea.vmem %s7, %s292
      %s294 = smul.u32 16, %s19
      %p295 = scmp.lt.s32.totalorder %s294, 31
      %s296 = scalar_select %p295, %s294, 31
      %s297 = smul.addr %s296, 8
      %s298 = scalar_lea.vmem %s0, %s297
      %s299 = smul.u32 16, %s19
      %s300 = smul.u32 16, %s19
      %p301 = scmp.lt.s32.totalorder %s300, 31
      %s302 = scalar_select %p301, %s300, 31
      %s303 = smul.addr %s302, 8
      %s304 = scalar_lea.vmem %s1, %s303
      %s305 = smul.u32 16, %s19
      %s306 = smul.u32 16, %s19
      %p307 = scmp.lt.s32.totalorder %s306, 31
      %s308 = scalar_select %p307, %s306, 31
      %s309 = smul.addr %s308, 8
      %s310 = scalar_lea.vmem %s6, %s309
      %s311 = smul.u32 16, %s19
      %s312 = smul.u32 16, %s19
      %p313 = scmp.lt.s32.totalorder %s312, 31
      %s314 = scalar_select %p313, %s312, 31
      %s315 = smul.addr %s314, 8
      %s316 = scalar_lea.vmem %s7, %s315
      %s317 = smul.u32 16, %s19
      %v318 = vld [vmem:[%s298] sm:$0xff]
      %v319 = vld [vmem:[%s298 + $0x8] sm:$0xff]
      %v320 = vld [vmem:[%s298 + $0x10] sm:$0xff]
      %v321 = vld [vmem:[%s298 + $0x18] sm:$0xff]
      %v322 = vld [vmem:[%s298 + $0x20] sm:$0xff]
      %v323 = vld [vmem:[%s298 + $0x28] sm:$0xff]
      %v324 = vld [vmem:[%s298 + $0x30] sm:$0xff]
      %v325 = vld [vmem:[%s298 + $0x38] sm:$0xff]
      %v326 = vld [vmem:[%s298 + $0x40] sm:$0xff]
      %v327 = vld [vmem:[%s298 + $0x48] sm:$0xff]
      %v328 = vld [vmem:[%s298 + $0x50] sm:$0xff]
      %v329 = vld [vmem:[%s298 + $0x58] sm:$0xff]
      %v330 = vld [vmem:[%s298 + $0x60] sm:$0xff]
      %v331 = vld [vmem:[%s298 + $0x68] sm:$0xff]
      %v332 = vld [vmem:[%s298 + $0x70] sm:$0xff]
      %v333 = vld [vmem:[%s298 + $0x78] sm:$0xff]
      %v334 = vld [vmem:[%s2] sm:$0x1]
      %v335 = vld [vmem:[%s3] sm:$0x1]
      %vm336 = vcmask 261120
      %v337 = vsel %vm336, %v318, 0.0
      %338 = vadd.xlane.f32.xlu0 %v337
      %v339 = vpop.xlane.xlu0 %338
      %v340 = vsel %vm336, %v319, 0.0
      %341 = vadd.xlane.f32.xlu0 %v340
      %v342 = vpop.xlane.xlu0 %341
      %v343 = vsel %vm336, %v320, 0.0
      %344 = vadd.xlane.f32.xlu0 %v343
      %v345 = vpop.xlane.xlu0 %344
      %v346 = vsel %vm336, %v321, 0.0
      %347 = vadd.xlane.f32.xlu0 %v346
      %v348 = vpop.xlane.xlu0 %347
      %v349 = vsel %vm336, %v322, 0.0
      %350 = vadd.xlane.f32.xlu0 %v349
      %v351 = vpop.xlane.xlu0 %350
      %v352 = vsel %vm336, %v323, 0.0
      %353 = vadd.xlane.f32.xlu0 %v352
      %v354 = vpop.xlane.xlu0 %353
      %v355 = vsel %vm336, %v324, 0.0
      %356 = vadd.xlane.f32.xlu0 %v355
      %v357 = vpop.xlane.xlu0 %356
      %v358 = vsel %vm336, %v325, 0.0
      %359 = vadd.xlane.f32.xlu0 %v358
      %v360 = vpop.xlane.xlu0 %359
      %v361 = vsel %vm336, %v326, 0.0
      %362 = vadd.xlane.f32.xlu0 %v361
      %v363 = vpop.xlane.xlu0 %362
      %v364 = vsel %vm336, %v327, 0.0
      %365 = vadd.xlane.f32.xlu0 %v364
      %v366 = vpop.xlane.xlu0 %365
      %v367 = vsel %vm336, %v328, 0.0
      %368 = vadd.xlane.f32.xlu0 %v367
      %v369 = vpop.xlane.xlu0 %368
      %v370 = vsel %vm336, %v329, 0.0
      %371 = vadd.xlane.f32.xlu0 %v370
      %v372 = vpop.xlane.xlu0 %371
      %v373 = vsel %vm336, %v330, 0.0
      %374 = vadd.xlane.f32.xlu0 %v373
      %v375 = vpop.xlane.xlu0 %374
      %v376 = vsel %vm336, %v331, 0.0
      %377 = vadd.xlane.f32.xlu0 %v376
      %v378 = vpop.xlane.xlu0 %377
      %v379 = vsel %vm336, %v332, 0.0
      %380 = vadd.xlane.f32.xlu0 %v379
      %v381 = vpop.xlane.xlu0 %380
      %v382 = vsel %vm336, %v333, 0.0
      %383 = vadd.xlane.f32.xlu0 %v382
      %v384 = vpop.xlane.xlu0 %383
      %v385 = vrcp.pop 32.0
      %v386 = vmul.f32 %v339, %v385
      %v387 = vmul.f32 %v342, %v385
      %v388 = vmul.f32 %v345, %v385
      %v389 = vmul.f32 %v348, %v385
      %v390 = vmul.f32 %v351, %v385
      %v391 = vmul.f32 %v354, %v385
      %v392 = vmul.f32 %v357, %v385
      %v393 = vmul.f32 %v360, %v385
      %v394 = vmul.f32 %v363, %v385
      %v395 = vmul.f32 %v366, %v385
      %v396 = vmul.f32 %v369, %v385
      %v397 = vmul.f32 %v372, %v385
      %v398 = vmul.f32 %v375, %v385
      %v399 = vmul.f32 %v378, %v385
      %v400 = vmul.f32 %v381, %v385
      %v401 = vmul.f32 %v384, %v385
      %v402 = vsub.f32 %v318, %v386
      %v403 = vsub.f32 %v319, %v387
      %v404 = vsub.f32 %v320, %v388
      %v405 = vsub.f32 %v321, %v389
      %v406 = vsub.f32 %v322, %v390
      %v407 = vsub.f32 %v323, %v391
      %v408 = vsub.f32 %v324, %v392
      %v409 = vsub.f32 %v325, %v393
      %v410 = vsub.f32 %v326, %v394
      %v411 = vsub.f32 %v327, %v395
      %v412 = vsub.f32 %v328, %v396
      %v413 = vsub.f32 %v329, %v397
      %v414 = vsub.f32 %v330, %v398
      %v415 = vsub.f32 %v331, %v399
      %v416 = vsub.f32 %v332, %v400
      %v417 = vsub.f32 %v333, %v401
      %v418 = vmul.f32 %v402, %v402
      %v419 = vmul.f32 %v403, %v403
      %v420 = vmul.f32 %v404, %v404
      %v421 = vmul.f32 %v405, %v405
      %v422 = vmul.f32 %v406, %v406
      %v423 = vmul.f32 %v407, %v407
      %v424 = vmul.f32 %v408, %v408
      %v425 = vmul.f32 %v409, %v409
      %v426 = vmul.f32 %v410, %v410
      %v427 = vmul.f32 %v411, %v411
      %v428 = vmul.f32 %v412, %v412
      %v429 = vmul.f32 %v413, %v413
      %v430 = vmul.f32 %v414, %v414
      %v431 = vmul.f32 %v415, %v415
      %v432 = vmul.f32 %v416, %v416
      %v433 = vmul.f32 %v417, %v417
      %v434 = vsel %vm336, %v418, 0.0
      %435 = vadd.xlane.f32.xlu0 %v434
      %v436 = vpop.xlane.xlu0 %435
      %v437 = vsel %vm336, %v419, 0.0
      %438 = vadd.xlane.f32.xlu0 %v437
      %v439 = vpop.xlane.xlu0 %438
      %v440 = vsel %vm336, %v420, 0.0
      %441 = vadd.xlane.f32.xlu0 %v440
      %v442 = vpop.xlane.xlu0 %441
      %v443 = vsel %vm336, %v421, 0.0
      %444 = vadd.xlane.f32.xlu0 %v443
      %v445 = vpop.xlane.xlu0 %444
      %v446 = vsel %vm336, %v422, 0.0
      %447 = vadd.xlane.f32.xlu0 %v446
      %v448 = vpop.xlane.xlu0 %447
      %v449 = vsel %vm336, %v423, 0.0
      %450 = vadd.xlane.f32.xlu0 %v449
      %v451 = vpop.xlane.xlu0 %450
      %v452 = vsel %vm336, %v424, 0.0
      %453 = vadd.xlane.f32.xlu0 %v452
      %v454 = vpop.xlane.xlu0 %453
      %v455 = vsel %vm336, %v425, 0.0
      %456 = vadd.xlane.f32.xlu0 %v455
      %v457 = vpop.xlane.xlu0 %456
      %v458 = vsel %vm336, %v426, 0.0
      %459 = vadd.xlane.f32.xlu0 %v458
      %v460 = vpop.xlane.xlu0 %459
      %v461 = vsel %vm336, %v427, 0.0
      %462 = vadd.xlane.f32.xlu0 %v461
      %v463 = vpop.xlane.xlu0 %462
      %v464 = vsel %vm336, %v428, 0.0
      %465 = vadd.xlane.f32.xlu0 %v464
      %v466 = vpop.xlane.xlu0 %465
      %v467 = vsel %vm336, %v429, 0.0
      %468 = vadd.xlane.f32.xlu0 %v467
      %v469 = vpop.xlane.xlu0 %468
      %v470 = vsel %vm336, %v430, 0.0
      %471 = vadd.xlane.f32.xlu0 %v470
      %v472 = vpop.xlane.xlu0 %471
      %v473 = vsel %vm336, %v431, 0.0
      %474 = vadd.xlane.f32.xlu0 %v473
      %v475 = vpop.xlane.xlu0 %474
      %v476 = vsel %vm336, %v432, 0.0
      %477 = vadd.xlane.f32.xlu0 %v476
      %v478 = vpop.xlane.xlu0 %477
      %v479 = vsel %vm336, %v433, 0.0
      %480 = vadd.xlane.f32.xlu0 %v479
      %v481 = vpop.xlane.xlu0 %480
      %v482 = vmul.f32 %v436, %v385
      %v483 = vmul.f32 %v439, %v385
      %v484 = vmul.f32 %v442, %v385
      %v485 = vmul.f32 %v445, %v385
      %v486 = vmul.f32 %v448, %v385
      %v487 = vmul.f32 %v451, %v385
      %v488 = vmul.f32 %v454, %v385
      %v489 = vmul.f32 %v457, %v385
      %v490 = vmul.f32 %v460, %v385
      %v491 = vmul.f32 %v463, %v385
      %v492 = vmul.f32 %v466, %v385
      %v493 = vmul.f32 %v469, %v385
      %v494 = vmul.f32 %v472, %v385
      %v495 = vmul.f32 %v475, %v385
      %v496 = vmul.f32 %v478, %v385
      %v497 = vmul.f32 %v481, %v385
      %v498 = vadd.f32 %v482, 1e-05
      %v499 = vadd.f32 %v483, 1e-05
      %v500 = vadd.f32 %v484, 1e-05
      %v501 = vadd.f32 %v485, 1e-05
      %v502 = vadd.f32 %v486, 1e-05
      %v503 = vadd.f32 %v487, 1e-05
      %v504 = vadd.f32 %v488, 1e-05
      %v505 = vadd.f32 %v489, 1e-05
      %v506 = vadd.f32 %v490, 1e-05
      %v507 = vadd.f32 %v491, 1e-05
      %v508 = vadd.f32 %v492, 1e-05
      %v509 = vadd.f32 %v493, 1e-05
      %v510 = vadd.f32 %v494, 1e-05
      %v511 = vadd.f32 %v495, 1e-05
      %v512 = vadd.f32 %v496, 1e-05
      %v513 = vadd.f32 %v497, 1e-05
      %v514 = vrsqrt.pop %v498
      %v515 = vrsqrt.pop %v499
      %v516 = vrsqrt.pop %v500
      %v517 = vrsqrt.pop %v501
      %v518 = vrsqrt.pop %v502
      %v519 = vrsqrt.pop %v503
      %v520 = vrsqrt.pop %v504
      %v521 = vrsqrt.pop %v505
      %v522 = vrsqrt.pop %v506
      %v523 = vrsqrt.pop %v507
      %v524 = vrsqrt.pop %v508
      %v525 = vrsqrt.pop %v509
      %v526 = vrsqrt.pop %v510
      %v527 = vrsqrt.pop %v511
      %v528 = vrsqrt.pop %v512
      %v529 = vrsqrt.pop %v513
      %v530 = vmul.f32 %v402, %v514
      %v531 = vmul.f32 %v403, %v515
      %v532 = vmul.f32 %v404, %v516
      %v533 = vmul.f32 %v405, %v517
      %v534 = vmul.f32 %v406, %v518
      %v535 = vmul.f32 %v407, %v519
      %v536 = vmul.f32 %v408, %v520
      %v537 = vmul.f32 %v409, %v521
      %v538 = vmul.f32 %v410, %v522
      %v539 = vmul.f32 %v411, %v523
      %v540 = vmul.f32 %v412, %v524
      %v541 = vmul.f32 %v413, %v525
      %v542 = vmul.f32 %v414, %v526
      %v543 = vmul.f32 %v415, %v527
      %v544 = vmul.f32 %v416, %v528
      %v545 = vmul.f32 %v417, %v529
      %v547 = vlaneseq
      %v548 = vshrl.u32 %v547, 7
      %v549 = vsub.s32 0, %v548
      %v550 = vrot.slane %v334, %v549
      %v552 = vmul.f32 %v530, %v550
      %v553 = vmul.f32 %v531, %v550
      %v554 = vmul.f32 %v532, %v550
      %v555 = vmul.f32 %v533, %v550
      %v556 = vmul.f32 %v534, %v550
      %v557 = vmul.f32 %v535, %v550
      %v558 = vmul.f32 %v536, %v550
      %v559 = vmul.f32 %v537, %v550
      %v560 = vmul.f32 %v538, %v550
      %v561 = vmul.f32 %v539, %v550
      %v562 = vmul.f32 %v540, %v550
      %v563 = vmul.f32 %v541, %v550
      %v564 = vmul.f32 %v542, %v550
      %v565 = vmul.f32 %v543, %v550
      %v566 = vmul.f32 %v544, %v550
      %v567 = vmul.f32 %v545, %v550
      %v569 = vlaneseq
      %v570 = vshrl.u32 %v569, 7
      %v571 = vsub.s32 0, %v570
      %v572 = vrot.slane %v335, %v571
      %v574 = vadd.f32 %v552, %v572
      %v575 = vadd.f32 %v553, %v572
      %v576 = vadd.f32 %v554, %v572
      %v577 = vadd.f32 %v555, %v572
      %v578 = vadd.f32 %v556, %v572
      %v579 = vadd.f32 %v557, %v572
      %v580 = vadd.f32 %v558, %v572
      %v581 = vadd.f32 %v559, %v572
      %v582 = vadd.f32 %v560, %v572
      %v583 = vadd.f32 %v561, %v572
      %v584 = vadd.f32 %v562, %v572
      %v585 = vadd.f32 %v563, %v572
      %v586 = vadd.f32 %v564, %v572
      %v587 = vadd.f32 %v565, %v572
      %v588 = vadd.f32 %v566, %v572
      %v589 = vadd.f32 %v567, %v572
      %v590 = vld [vmem:[%s4] sm:$0xff]
      %v591 = vld [vmem:[%s4 + $0x8] sm:$0xff]
      %v592 = vld [vmem:[%s4 + $0x10] sm:$0xff]
      %v593 = vld [vmem:[%s4 + $0x18] sm:$0xff]
      %v594 = vld [vmem:[%s5] sm:$0x1]
      %v596 = vlaneseq
      %v597 = vshrl.u32 %v596, 7
      %v598 = vsub.s32 0, %v597
      %v599 = vrot.slane %v594, %v598
      %v602 = vsel %vm336, %v574, 0
      %v605 = vsel %vm336, %v575, 0
      %v608 = vsel %vm336, %v576, 0
      %v611 = vsel %vm336, %v577, 0
      %v614 = vsel %vm336, %v578, 0
      %v617 = vsel %vm336, %v579, 0
      %v620 = vsel %vm336, %v580, 0
      %v623 = vsel %vm336, %v581, 0
      %v626 = vsel %vm336, %v582, 0
      %v629 = vsel %vm336, %v583, 0
      %v632 = vsel %vm336, %v584, 0
      %v635 = vsel %vm336, %v585, 0
      %v638 = vsel %vm336, %v586, 0
      %v641 = vsel %vm336, %v587, 0
      %v644 = vsel %vm336, %v588, 0
      %v647 = vsel %vm336, %v589, 0
      %649 = vmatprep.subr.mxu0 0.0
      %650 = vmatpush1.msra.mxu0 %v590
      %651 = vmatprep.subr.mxu0 0.0
      %652 = vmatpush1.msra.mxu0 %v591
      %653 = vmatprep.subr.mxu0 0.0
      %654 = vmatpush1.msra.mxu0 %v592
      %655 = vmatprep.subr.mxu0 0.0
      %656 = vmatpush1.msra.mxu0 %v593
      %657 = vmatprep.subr.mxu0 0.0
      %658 = vmatpush1.msra.mxu0 0.0
      %659 = vmatprep.subr.mxu0 0.0
      %660 = vmatpush1.msra.mxu0 0.0
      %661 = vmatprep.subr.mxu0 0.0
      %662 = vmatpush1.msra.mxu0 0.0
      %663 = vmatprep.subr.mxu0 0.0
      %664 = vmatpush1.msra.mxu0 0.0
      %665 = vmatprep.subr.mxu0 0.0
      %666 = vmatpush1.msra.mxu0 0.0
      %667 = vmatprep.subr.mxu0 0.0
      %668 = vmatpush1.msra.mxu0 0.0
      %669 = vmatprep.subr.mxu0 0.0
      %670 = vmatpush1.msra.mxu0 0.0
      %671 = vmatprep.subr.mxu0 0.0
      %672 = vmatpush1.msra.mxu0 0.0
      %673 = vmatprep.subr.mxu0 0.0
      %674 = vmatpush1.msra.mxu0 0.0
      %675 = vmatprep.subr.mxu0 0.0
      %676 = vmatpush1.msra.mxu0 0.0
      %677 = vmatprep.subr.mxu0 0.0
      %678 = vmatpush1.msra.mxu0 0.0
      %679 = vmatprep.subr.mxu0 0.0
      %680 = vmatpush1.msra.mxu0 0.0
      %681 = vmatprep.subr.mxu0 0.0
      %682 = vmatpush1.msra.mxu0 0.0
      %683 = vmatprep.subr.mxu0 0.0
      %684 = vmatpush1.msra.mxu0 0.0
      %685 = vmatprep.subr.mxu0 0.0
      %686 = vmatpush1.msra.mxu0 0.0
      %687 = vmatprep.subr.mxu0 0.0
      %688 = vmatpush1.msra.mxu0 0.0
      %689 = vmatprep.subr.mxu0 0.0
      %690 = vmatpush1.msra.mxu0 0.0
      %691 = vmatprep.subr.mxu0 0.0
      %692 = vmatpush1.msra.mxu0 0.0
      %693 = vmatprep.subr.mxu0 0.0
      %694 = vmatpush1.msra.mxu0 0.0
      %695 = vmatprep.subr.mxu0 0.0
      %696 = vmatpush1.msra.mxu0 0.0
      %697 = vmatprep.subr.mxu0 0.0
      %698 = vmatpush1.msra.mxu0 0.0
      %699 = vmatprep.subr.mxu0 0.0
      %700 = vmatpush1.msra.mxu0 0.0
      %701 = vmatprep.subr.mxu0 0.0
      %702 = vmatpush1.msra.mxu0 0.0
      %703 = vmatprep.subr.mxu0 0.0
      %704 = vmatpush1.msra.mxu0 0.0
      %705 = vmatprep.subr.mxu0 0.0
      %706 = vmatpush1.msra.mxu0 0.0
      %707 = vmatprep.subr.mxu0 0.0
      %708 = vmatpush1.msra.mxu0 0.0
      %709 = vmatprep.subr.mxu0 0.0
      %710 = vmatpush1.msra.mxu0 0.0
      %711 = vmatprep.subr.mxu0 0.0
      %712 = vmatpush1.msra.mxu0 0.0
      %713 = vmatprep.mubr.f32.mxu0 0.0
      %714 = vmatmul.mubr.f32.gmra.mrb[0].mxu0 %v602
      %v715 = vpop.f32.mrb[0].mxu0
      %v716 = vadd.f32 %v599, %v715
      %v717 = vpop.f32.mrb[0].mxu0
      %718 = vmatprep.mubr.f32.mxu0 0.0
      %719 = vmatmul.mubr.f32.gmra.mrb[0].mxu0 %v605
      %v720 = vpop.f32.mrb[0].mxu0
      %v721 = vadd.f32 %v599, %v720
      %v722 = vpop.f32.mrb[0].mxu0
      %723 = vmatprep.mubr.f32.mxu0 0.0
      %724 = vmatmul.mubr.f32.gmra.mrb[0].mxu0 %v608
      %v725 = vpop.f32.mrb[0].mxu0
      %v726 = vadd.f32 %v599, %v725
      %v727 = vpop.f32.mrb[0].mxu0
      %728 = vmatprep.mubr.f32.mxu0 0.0
      %729 = vmatmul.mubr.f32.gmra.mrb[0].mxu0 %v611
      %v730 = vpop.f32.mrb[0].mxu0
      %v731 = vadd.f32 %v599, %v730
      %v732 = vpop.f32.mrb[0].mxu0
      %733 = vmatprep.mubr.f32.mxu0 0.0
      %734 = vmatmul.mubr.f32.gmra.mrb[0].mxu0 %v614
      %v735 = vpop.f32.mrb[0].mxu0
      %v736 = vadd.f32 %v599, %v735
      %v737 = vpop.f32.mrb[0].mxu0
      %738 = vmatprep.mubr.f32.mxu0 0.0
      %739 = vmatmul.mubr.f32.gmra.mrb[0].mxu0 %v617
      %v740 = vpop.f32.mrb[0].mxu0
      %v741 = vadd.f32 %v599, %v740
      %v742 = vpop.f32.mrb[0].mxu0
      %743 = vmatprep.mubr.f32.mxu0 0.0
      %744 = vmatmul.mubr.f32.gmra.mrb[0].mxu0 %v620
      %v745 = vpop.f32.mrb[0].mxu0
      %v746 = vadd.f32 %v599, %v745
      %v747 = vpop.f32.mrb[0].mxu0
      %748 = vmatprep.mubr.f32.mxu0 0.0
      %749 = vmatmul.mubr.f32.gmra.mrb[0].mxu0 %v623
      %v750 = vpop.f32.mrb[0].mxu0
      %v751 = vadd.f32 %v599, %v750
      %v752 = vpop.f32.mrb[0].mxu0
      %753 = vmatprep.mubr.f32.mxu0 0.0
      %754 = vmatmul.mubr.f32.gmra.mrb[0].mxu0 %v626
      %v755 = vpop.f32.mrb[0].mxu0
      %v756 = vadd.f32 %v599, %v755
      %v757 = vpop.f32.mrb[0].mxu0
      %758 = vmatprep.mubr.f32.mxu0 0.0
      %759 = vmatmul.mubr.f32.gmra.mrb[0].mxu0 %v629
      %v760 = vpop.f32.mrb[0].mxu0
      %v761 = vadd.f32 %v599, %v760
      %v762 = vpop.f32.mrb[0].mxu0
      %763 = vmatprep.mubr.f32.mxu0 0.0
      %764 = vmatmul.mubr.f32.gmra.mrb[0].mxu0 %v632
      %v765 = vpop.f32.mrb[0].mxu0
      %v766 = vadd.f32 %v599, %v765
      %v767 = vpop.f32.mrb[0].mxu0
      %768 = vmatprep.mubr.f32.mxu0 0.0
      %769 = vmatmul.mubr.f32.gmra.mrb[0].mxu0 %v635
      %v770 = vpop.f32.mrb[0].mxu0
      %v771 = vadd.f32 %v599, %v770
      %v772 = vpop.f32.mrb[0].mxu0
      %773 = vmatprep.mubr.f32.mxu0 0.0
      %774 = vmatmul.mubr.f32.gmra.mrb[0].mxu0 %v638
      %v775 = vpop.f32.mrb[0].mxu0
      %v776 = vadd.f32 %v599, %v775
      %v777 = vpop.f32.mrb[0].mxu0
      %778 = vmatprep.mubr.f32.mxu0 0.0
      %779 = vmatmul.mubr.f32.gmra.mrb[0].mxu0 %v641
      %v780 = vpop.f32.mrb[0].mxu0
      %v781 = vadd.f32 %v599, %v780
      %v782 = vpop.f32.mrb[0].mxu0
      %783 = vmatprep.mubr.f32.mxu0 0.0
      %784 = vmatmul.mubr.f32.gmra.mrb[0].mxu0 %v644
      %v785 = vpop.f32.mrb[0].mxu0
      %v786 = vadd.f32 %v599, %v785
      %v787 = vpop.f32.mrb[0].mxu0
      %788 = vmatprep.mubr.f32.mxu0 0.0
      %789 = vmatmul.mubr.f32.gmra.mrb[0].mxu0 %v647
      %v790 = vpop.f32.mrb[0].mxu0
      %v791 = vadd.f32 %v599, %v790
      %v792 = vpop.f32.mrb[0].mxu0
      %793 = vdwg.mxu0
      %v794 = vld [vmem:[%s304] sm:$0xff]
      %v795 = vld [vmem:[%s304 + $0x8] sm:$0xff]
      %v796 = vld [vmem:[%s304 + $0x10] sm:$0xff]
      %v797 = vld [vmem:[%s304 + $0x18] sm:$0xff]
      %v798 = vld [vmem:[%s304 + $0x20] sm:$0xff]
      %v799 = vld [vmem:[%s304 + $0x28] sm:$0xff]
      %v800 = vld [vmem:[%s304 + $0x30] sm:$0xff]
      %v801 = vld [vmem:[%s304 + $0x38] sm:$0xff]
      %v802 = vld [vmem:[%s304 + $0x40] sm:$0xff]
      %v803 = vld [vmem:[%s304 + $0x48] sm:$0xff]
      %v804 = vld [vmem:[%s304 + $0x50] sm:$0xff]
      %v805 = vld [vmem:[%s304 + $0x58] sm:$0xff]
      %v806 = vld [vmem:[%s304 + $0x60] sm:$0xff]
      %v807 = vld [vmem:[%s304 + $0x68] sm:$0xff]
      %v808 = vld [vmem:[%s304 + $0x70] sm:$0xff]
      %v809 = vld [vmem:[%s304 + $0x78] sm:$0xff]
      %811 = vset.pattern.permute.xlu0 0
      %812 = vperm.xlu0 %811, %v794
      %v813 = vpop.permute.xlu0 %812
      %816 = vset.pattern.permute.xlu0 0
      %817 = vperm.xlu0 %816, %v795
      %v818 = vpop.permute.xlu0 %817
      %821 = vset.pattern.permute.xlu0 0
      %822 = vperm.xlu0 %821, %v796
      %v823 = vpop.permute.xlu0 %822
      %826 = vset.pattern.permute.xlu0 0
      %827 = vperm.xlu0 %826, %v797
      %v828 = vpop.permute.xlu0 %827
      %831 = vset.pattern.permute.xlu0 0
      %832 = vperm.xlu0 %831, %v798
      %v833 = vpop.permute.xlu0 %832
      %836 = vset.pattern.permute.xlu0 0
      %837 = vperm.xlu0 %836, %v799
      %v838 = vpop.permute.xlu0 %837
      %841 = vset.pattern.permute.xlu0 0
      %842 = vperm.xlu0 %841, %v800
      %v843 = vpop.permute.xlu0 %842
      %846 = vset.pattern.permute.xlu0 0
      %847 = vperm.xlu0 %846, %v801
      %v848 = vpop.permute.xlu0 %847
      %851 = vset.pattern.permute.xlu0 0
      %852 = vperm.xlu0 %851, %v802
      %v853 = vpop.permute.xlu0 %852
      %856 = vset.pattern.permute.xlu0 0
      %857 = vperm.xlu0 %856, %v803
      %v858 = vpop.permute.xlu0 %857
      %861 = vset.pattern.permute.xlu0 0
      %862 = vperm.xlu0 %861, %v804
      %v863 = vpop.permute.xlu0 %862
      %866 = vset.pattern.permute.xlu0 0
      %867 = vperm.xlu0 %866, %v805
      %v868 = vpop.permute.xlu0 %867
      %871 = vset.pattern.permute.xlu0 0
      %872 = vperm.xlu0 %871, %v806
      %v873 = vpop.permute.xlu0 %872
      %876 = vset.pattern.permute.xlu0 0
      %877 = vperm.xlu0 %876, %v807
      %v878 = vpop.permute.xlu0 %877
      %881 = vset.pattern.permute.xlu0 0
      %882 = vperm.xlu0 %881, %v808
      %v883 = vpop.permute.xlu0 %882
      %886 = vset.pattern.permute.xlu0 0
      %887 = vperm.xlu0 %886, %v809
      %v888 = vpop.permute.xlu0 %887
      %v890 = vmul.f32 %v813, %v716
      %v891 = vmul.f32 %v818, %v721
      %v892 = vmul.f32 %v823, %v726
      %v893 = vmul.f32 %v828, %v731
      %v894 = vmul.f32 %v833, %v736
      %v895 = vmul.f32 %v838, %v741
      %v896 = vmul.f32 %v843, %v746
      %v897 = vmul.f32 %v848, %v751
      %v898 = vmul.f32 %v853, %v756
      %v899 = vmul.f32 %v858, %v761
      %v900 = vmul.f32 %v863, %v766
      %v901 = vmul.f32 %v868, %v771
      %v902 = vmul.f32 %v873, %v776
      %v903 = vmul.f32 %v878, %v781
      %v904 = vmul.f32 %v883, %v786
      %v905 = vmul.f32 %v888, %v791
      %vm906 = vcmask 64512
      %907 = vst.msk [vmem:[%s310] sm:$0xff] %vm906, %v890
      %908 = vst.msk [vmem:[%s310 + $0x8] sm:$0xff] %vm906, %v891
      %909 = vst.msk [vmem:[%s310 + $0x10] sm:$0xff] %vm906, %v892
      %910 = vst.msk [vmem:[%s310 + $0x18] sm:$0xff] %vm906, %v893
      %911 = vst.msk [vmem:[%s310 + $0x20] sm:$0xff] %vm906, %v894
      %912 = vst.msk [vmem:[%s310 + $0x28] sm:$0xff] %vm906, %v895
      %913 = vst.msk [vmem:[%s310 + $0x30] sm:$0xff] %vm906, %v896
      %914 = vst.msk [vmem:[%s310 + $0x38] sm:$0xff] %vm906, %v897
      %915 = vst.msk [vmem:[%s310 + $0x40] sm:$0xff] %vm906, %v898
      %916 = vst.msk [vmem:[%s310 + $0x48] sm:$0xff] %vm906, %v899
      %917 = vst.msk [vmem:[%s310 + $0x50] sm:$0xff] %vm906, %v900
      %918 = vst.msk [vmem:[%s310 + $0x58] sm:$0xff] %vm906, %v901
      %919 = vst.msk [vmem:[%s310 + $0x60] sm:$0xff] %vm906, %v902
      %920 = vst.msk [vmem:[%s310 + $0x68] sm:$0xff] %vm906, %v903
      %921 = vst.msk [vmem:[%s310 + $0x70] sm:$0xff] %vm906, %v904
      %922 = vst.msk [vmem:[%s310 + $0x78] sm:$0xff] %vm906, %v905
      %939 = vrot.lane.b32.xlu0 %v890, 120
      %v940 = vpop.permute.xlu0 %939
      %941 = vrot.lane.b32.xlu0 %v891, 120
      %v942 = vpop.permute.xlu0 %941
      %943 = vrot.lane.b32.xlu0 %v892, 120
      %v944 = vpop.permute.xlu0 %943
      %945 = vrot.lane.b32.xlu0 %v893, 120
      %v946 = vpop.permute.xlu0 %945
      %947 = vrot.lane.b32.xlu0 %v894, 120
      %v948 = vpop.permute.xlu0 %947
      %949 = vrot.lane.b32.xlu0 %v895, 120
      %v950 = vpop.permute.xlu0 %949
      %951 = vrot.lane.b32.xlu0 %v896, 120
      %v952 = vpop.permute.xlu0 %951
      %953 = vrot.lane.b32.xlu0 %v897, 120
      %v954 = vpop.permute.xlu0 %953
      %955 = vrot.lane.b32.xlu0 %v898, 120
      %v956 = vpop.permute.xlu0 %955
      %957 = vrot.lane.b32.xlu0 %v899, 120
      %v958 = vpop.permute.xlu0 %957
      %959 = vrot.lane.b32.xlu0 %v900, 120
      %v960 = vpop.permute.xlu0 %959
      %961 = vrot.lane.b32.xlu0 %v901, 120
      %v962 = vpop.permute.xlu0 %961
      %963 = vrot.lane.b32.xlu0 %v902, 120
      %v964 = vpop.permute.xlu0 %963
      %965 = vrot.lane.b32.xlu0 %v903, 120
      %v966 = vpop.permute.xlu0 %965
      %967 = vrot.lane.b32.xlu0 %v904, 120
      %v968 = vpop.permute.xlu0 %967
      %969 = vrot.lane.b32.xlu0 %v905, 120
      %v970 = vpop.permute.xlu0 %969
      %987 = vst.msk [vmem:[%s316] sm:$0xff] %vm906, %v940
      %988 = vst.msk [vmem:[%s316 + $0x8] sm:$0xff] %vm906, %v942
      %989 = vst.msk [vmem:[%s316 + $0x10] sm:$0xff] %vm906, %v944
      %990 = vst.msk [vmem:[%s316 + $0x18] sm:$0xff] %vm906, %v946
      %991 = vst.msk [vmem:[%s316 + $0x20] sm:$0xff] %vm906, %v948
      %992 = vst.msk [vmem:[%s316 + $0x28] sm:$0xff] %vm906, %v950
      %993 = vst.msk [vmem:[%s316 + $0x30] sm:$0xff] %vm906, %v952
      %994 = vst.msk [vmem:[%s316 + $0x38] sm:$0xff] %vm906, %v954
      %995 = vst.msk [vmem:[%s316 + $0x40] sm:$0xff] %vm906, %v956
      %996 = vst.msk [vmem:[%s316 + $0x48] sm:$0xff] %vm906, %v958
      %997 = vst.msk [vmem:[%s316 + $0x50] sm:$0xff] %vm906, %v960
      %998 = vst.msk [vmem:[%s316 + $0x58] sm:$0xff] %vm906, %v962
      %999 = vst.msk [vmem:[%s316 + $0x60] sm:$0xff] %vm906, %v964
      %1000 = vst.msk [vmem:[%s316 + $0x68] sm:$0xff] %vm906, %v966
      %1001 = vst.msk [vmem:[%s316 + $0x70] sm:$0xff] %vm906, %v968
      %1002 = vst.msk [vmem:[%s316 + $0x78] sm:$0xff] %vm906, %v970
      %s1003 = smul.u32 16, %s19
      %p1004 = scmp.lt.s32.totalorder %s1003, 31
      %s1005 = scalar_select %p1004, %s1003, 31
      %s1006 = smul.addr %s1005, 8
      %s1007 = scalar_lea.vmem %s6, %s1006
      %s1008 = smul.u32 16, %s19
      %p1009 = scmp.lt.s32.totalorder %s1008, 31
      %s1010 = scalar_select %p1009, %s1008, 31
      %s1011 = smul.addr %s1010, 8
      %s1012 = scalar_lea.vmem %s7, %s1011
      // Predicated region
      $region45: #{tpu_custom_call.1} parent=43 // pred_check
        %p1013 = pneg %p173
      $region46: #{tpu_custom_call.1} parent=43 // pred_check_branch
        %1015 = sbr.rel (%p1013) target = $region48
      $region47: #{tpu_custom_call.1} parent=43 // pred_region
        %s1016 = smul.u32 16, %s19
      $region48: #{tpu_custom_call.1} parent=43 // pred_fallthru
        _
      // Predicated region
      $region49: #{tpu_custom_call.1} parent=43 // pred_check
        %p1017 = pneg %p199
      $region50: #{tpu_custom_call.1} parent=43 // pred_check_branch
        %1019 = sbr.rel (%p1017) target = $region52
      $region51: #{tpu_custom_call.1} parent=43 // pred_region
        %s1020 = smul.u32 16, %s19
      $region52: #{tpu_custom_call.1} parent=43 // pred_fallthru
        _
    $region44: #{tpu_custom_call.1} parent=5 // pred_fallthru
      _
    %p1021 = scmp.le.s32.totalorder 2, %s14
    // Predicated region
    $region53: #{tpu_custom_call.1} parent=5 // pred_check
      %p1022 = pneg %p1021
    $region54: #{tpu_custom_call.1} parent=5 // pred_check_branch
      %1024 = sbr.rel (%p1022) target = $region56
    $region55: #{tpu_custom_call.1} parent=5 // pred_region
      %s1025 = ssub.s32 %s14, 2
      // Predicated region
      $region57: #{tpu_custom_call.1} parent=55 // pred_check
        %p1026 = pneg %p179
      $region58: #{tpu_custom_call.1} parent=55 // pred_check_branch
        %1028 = sbr.rel (%p1026) target = $region60
      $region59: #{tpu_custom_call.1} parent=55 // pred_region
        %s1029 = smul.u32 16, %s20
        %p1030 = scmp.lt.s32.totalorder %s1029, 31
        %s1031 = scalar_select %p1030, %s1029, 31
        %s1032 = smul.addr %s1031, 8
        %s1033 = scalar_lea.vmem %s6, %s1032
      $region60: #{tpu_custom_call.1} parent=55 // pred_fallthru
        _
      // Predicated region
      $region61: #{tpu_custom_call.1} parent=55 // pred_check
        %p1034 = pneg %p205
      $region62: #{tpu_custom_call.1} parent=55 // pred_check_branch
        %1036 = sbr.rel (%p1034) target = $region64
      $region63: #{tpu_custom_call.1} parent=55 // pred_region
        %s1037 = smul.u32 16, %s20
        %p1038 = scmp.lt.s32.totalorder %s1037, 31
        %s1039 = scalar_select %p1038, %s1037, 31
        %s1040 = smul.addr %s1039, 8
        %s1041 = scalar_lea.vmem %s7, %s1040
      $region64: #{tpu_custom_call.1} parent=55 // pred_fallthru
        _
    $region56: #{tpu_custom_call.1} parent=5 // pred_fallthru
      _
  $region6: #{tpu_custom_call.1} parent=0 // loop_footer
    %s18 = sadd.s32 1, %s14
  $region7: #{tpu_custom_call.1} parent=0 // loop_footer_branch
    %13 = sbr.rel target = $region3
  $region8: #{tpu_custom_call.1} parent=0 // loop_exit
    _

</llo_original>
